<compile_context>
chip_gen: v7x
topology: tpu7x:2x2x1
jax: 0.10.0
libtpu: 0.0.40
codegen_flags: <defaults>
</compile_context>

<pallas_src>
from functools import partial

import jax
import jax.numpy as jnp
from jax.experimental import pallas as pl
from jax.experimental.pallas import tpu as pltpu


# ------------------------------ tiling helpers ------------------------------
def _round_up(x, m):
    return ((x + m - 1) // m) * m


def _m_tile(M, K):
    """M-tile: multiple of 128 (or the full M when M is small).

    Sized so one (tm, K) bf16 A buffer stays <= ~8 MiB (the pipeline
    double-buffers it), capped at 1024 rows.
    """
    budget_bytes = 8 * 1024 * 1024
    cap = (budget_bytes // (K * 2)) // 128 * 128
    cap = max(128, min(1024, cap))
    return M if M <= cap else cap


# ------------------------ Pallas kernel: fused GEMM --------------------------
def _gemm_bias_act_kernel(p_ref, w_ref, b_ref, o_ref, *, negative_slope):
    """One (tm, Np) output tile: full-K bf16 GEMM (f32 acc) + bias + LeakyReLU."""
    acc = jnp.dot(p_ref[...], w_ref[...], preferred_element_type=jnp.float32)
    acc = acc + b_ref[...]                              # (tm, Np) + (1, Np), f32
    if negative_slope is not None:
        acc = jnp.where(acc >= 0.0, acc, negative_slope * acc)
    o_ref[...] = acc.astype(o_ref.dtype)


def fused_conv_gemm(patches, w_mat, b_row, negative_slope, out_dtype):
    """patches: (M, K) bf16; w_mat: (K, Np) bf16; b_row: (1, Np) f32.

    K and Np are multiples of 128 (guaranteed by channel/weight packing); no
    padded copy of `patches` is made.  Returns (M, Np) of `out_dtype`; the
    caller slices the channel axis back to the true Cout.
    """
    M, K = patches.shape
    Kw, Np = w_mat.shape
    assert K == Kw and K % 128 == 0, (K, Kw)
    assert Np % 128 == 0 and b_row.shape == (1, Np), (Np, b_row.shape)

    tm = _m_tile(M, K)
    grid = (pl.cdiv(M, tm),)

    flops = 2 * M * Np * K
    bytes_accessed = (
        M * K * 2 + K * Np * 2 + Np * 4 + M * Np * jnp.dtype(out_dtype).itemsize
    )

    kernel = partial(_gemm_bias_act_kernel, negative_slope=negative_slope)
    return pl.pallas_call(
        kernel,
        out_shape=jax.ShapeDtypeStruct((M, Np), out_dtype),
        grid_spec=pltpu.PrefetchScalarGridSpec(
            num_scalar_prefetch=0,
            grid=grid,
            in_specs=[
                pl.BlockSpec((tm, K), lambda i: (i, 0)),    # A: streamed once
                pl.BlockSpec((K, Np), lambda i: (0, 0)),    # W: VMEM-resident
                pl.BlockSpec((1, Np), lambda i: (0, 0)),    # bias: resident
            ],
            out_specs=pl.BlockSpec((tm, Np), lambda i: (i, 0)),
        ),
        compiler_params=pltpu.CompilerParams(
            # v7x: with >=2 M blocks this axis shards across both TensorCores;
            # for the tiny late layers (1 block) one TC idles, which is cheap.
            dimension_semantics=("parallel",),
            vmem_limit_bytes=48 * 1024 * 1024,
        ),
        cost_estimate=pl.CostEstimate(
            flops=flops, transcendentals=0, bytes_accessed=bytes_accessed
        ),
    )(patches, w_mat, b_row)


# ------------------------- NHWC im2col (JAX glue) ----------------------------
def _im2col_nhwc(x, kh, kw, stride, pad):
    """x: (N, H, W, C) -> (N*Hout*Wout, kh*kw*C); K ordered (kh, kw, C)."""
    N, H, W, C = x.shape
    xp = jnp.pad(x, ((0, 0), (pad, pad), (pad, pad), (0, 0)))
    Hout = (H + 2 * pad - kh) // stride + 1
    Wout = (W + 2 * pad - kw) // stride + 1
    cols = []
    for i in range(kh):
        for j in range(kw):
            cols.append(
                xp[
                    :,
                    i : i + stride * (Hout - 1) + 1 : stride,
                    j : j + stride * (Wout - 1) + 1 : stride,
                    :,
                ]
            )
    patches = jnp.stack(cols, axis=3)               # (N, Hout, Wout, kh*kw, C)
    # TODO(synk): fuse this unfold into the Pallas kernel (halo'd spatial blocks)
    # for the stride-1 layers to remove the HBM round-trip of the patches matrix.
    return patches.reshape(N * Hout * Wout, kh * kw * C), Hout, Wout


def conv2d_nhwc(x, w_mat, b_row, cout, kh, kw, stride, pad, negative_slope, out_dtype):
    """NHWC Conv2d (+ optional LeakyReLU) via one fused Pallas GEMM."""
    N, H, W, C = x.shape
    Cp = _round_up(C, 8)                            # 16*Cp is a multiple of 128
    if Cp != C:
        # Cheap channel pad (layer 1 only) — replaces the former full padded
        # copy of the much larger patches matrix.
        x = jnp.pad(x, ((0, 0), (0, 0), (0, 0), (0, Cp - C)))
    patches, Hout, Wout = _im2col_nhwc(x, kh, kw, stride, pad)
    y = fused_conv_gemm(patches, w_mat, b_row, negative_slope, out_dtype)
    return y[:, :cout].reshape(N, Hout, Wout, cout)


# ---------------- NoNormDiscriminator: params + forward pass -----------------
def make_layer_specs(input_nc, ndf=64, n_layers=3):
    """(cin, cout, stride, apply_leaky) per conv, matching the PyTorch module."""
    specs = [(input_nc, ndf, 2, True)]
    nf_mult = 1
    for n in range(1, n_layers):
        nf_mult_prev, nf_mult = nf_mult, min(2 ** n, 8)
        specs.append((ndf * nf_mult_prev, ndf * nf_mult, 2, True))
    nf_mult_prev, nf_mult = nf_mult, min(2 ** n_layers, 8)
    specs.append((ndf * nf_mult_prev, ndf * nf_mult, 1, True))
    specs.append((ndf * nf_mult, 1, 1, False))
    return specs


def init_params(key, specs, kw_size=4):
    params = []
    for idx, (cin, cout, _, _) in enumerate(specs):
        k_w, k_b = jax.random.split(jax.random.fold_in(key, idx))
        w = jax.random.normal(k_w, (cout, cin, kw_size, kw_size), jnp.float32) * 0.05
        b = jax.random.normal(k_b, (cout,), jnp.float32) * 0.05
        params.append((w, b))
    return params


def pack_params(params):
    """Hoisted packing: (Cout,Cin,kh,kw) f32 -> ((kh*kw*Cin_pad, Np) bf16, (1,Np) f32).

    Cin is padded to a multiple of 8 (so K is a multiple of 128) and Cout to a
    multiple of 128 (lane-dense output); padding rows/cols are zeros.
    """
    packed = []
    for w, b in params:
        cout, cin, kh, kw = w.shape
        cin_p = _round_up(cin, 8)
        Np = _round_up(cout, 128)
        w_t = jnp.transpose(w, (2, 3, 1, 0))        # (kh, kw, cin, cout): K=(kh,kw,C)
        w_t = jnp.pad(w_t, ((0, 0), (0, 0), (0, cin_p - cin), (0, Np - cout)))
        w_mat = w_t.reshape(kh * kw * cin_p, Np).astype(jnp.bfloat16)
        b_row = jnp.pad(b, (0, Np - cout)).reshape(1, Np).astype(jnp.float32)
        packed.append((w_mat, b_row))
    return packed


def no_norm_discriminator_forward(x_nchw, packed, specs, use_sigmoid=False, kw_size=4):
    # padw = int(np.ceil((kw-1)/2)) = 2 for kw=4, exactly as in the PyTorch spec.
    padw = -(-(kw_size - 1) // 2)
    x = jnp.transpose(x_nchw, (0, 2, 3, 1)).astype(jnp.bfloat16)    # NCHW -> NHWC
    n_convs = len(specs)
    for idx, ((w_mat, b_row), (_, cout, stride, leaky)) in enumerate(zip(packed, specs)):
        last = idx == n_convs - 1
        x = conv2d_nhwc(
            x, w_mat, b_row, cout, kw_size, kw_size, stride, padw,
            negative_slope=0.2 if leaky else None,
            out_dtype=jnp.float32 if last else jnp.bfloat16,
        )
    if use_sigmoid:
        # TODO(synk): sigmoid path unused by default (use_sigmoid=False); plain JAX if requested.
        x = jax.nn.sigmoid(x)
    return jnp.transpose(x, (0, 3, 1, 2))           # NHWC -> NCHW (f32)


if __name__ == "__main__":
    key = jax.random.PRNGKey(0)
    k_in, k_par = jax.random.split(key)

    batch, input_nc, H, W = 2, 4, 16, 16
    ndf, n_layers = 8, 3

    x = jax.random.normal(k_in, (batch, input_nc, H, W), jnp.float32)

    specs = make_layer_specs(input_nc, ndf=ndf, n_layers=n_layers)
    params = init_params(k_par, specs)
    packed = pack_params(params)   # weight repacking hoisted out of the forward path

    fwd = jax.jit(partial(no_norm_discriminator_forward, specs=specs))
    out = jax.block_until_ready(fwd(x, packed))

    # Expected PatchGAN output for 16x16 input with this config: (2, 1, 5, 5)
    assert out.shape == (batch, 1, 5, 5), out.shape
    assert out.dtype == jnp.float32, out.dtype
    print("KERNEL_OK")
</pallas_src>

<mosaic_0001>
module attributes {stable_mosaic.version = 11 : i64} {
  func.func @_gemm_bias_act_kernel(%arg0: i32, %arg1: memref<162x128xbf16, #tpu.memory_space<vmem>>, %arg2: memref<128x128xbf16, #tpu.memory_space<vmem>>, %arg3: memref<1x128xf32, #tpu.memory_space<vmem>>, %arg4: memref<162x128xbf16, #tpu.memory_space<vmem>>) attributes {dimension_semantics = [#tpu.dimension_semantics<parallel>], iteration_bounds = array<i64: 1>, scalar_prefetch = 0 : i64, scratch_operands = 0 : i64, tpu.core_type = #tpu.core_type<tc>, window_params = [{transform_indices = @transform_0, window_bounds = array<i64: 162, 128>}, {pipeline_mode = #tpu.pipeline_mode<synchronous>, transform_indices = @transform_1, window_bounds = array<i64: 128, 128>}, {pipeline_mode = #tpu.pipeline_mode<synchronous>, transform_indices = @transform_2, window_bounds = array<i64: 1, 128>}, {transform_indices = @transform_3, window_bounds = array<i64: 162, 128>}]} {
    %c0 = arith.constant 0 : index
    %c0_0 = arith.constant 0 : index
    %0 = vector.load %arg1[%c0, %c0_0] : memref<162x128xbf16, #tpu.memory_space<vmem>>, vector<162x128xbf16>
    %c0_1 = arith.constant 0 : index
    %c0_2 = arith.constant 0 : index
    %1 = vector.load %arg2[%c0_1, %c0_2] : memref<128x128xbf16, #tpu.memory_space<vmem>>, vector<128x128xbf16>
    %cst = arith.constant dense<0.000000e+00> : vector<162x128xf32>
    %2 = tpu.matmul %0, %1, %cst {dimension_numbers = #tpu.dot_dimension_numbers<[1], [0], [0], [1], [0, 0, 1, 1], [], []>} : vector<162x128xbf16>, vector<128x128xbf16>, vector<162x128xf32> -> vector<162x128xf32>
    %c0_3 = arith.constant 0 : index
    %c0_4 = arith.constant 0 : index
    %3 = vector.load %arg3[%c0_3, %c0_4] : memref<1x128xf32, #tpu.memory_space<vmem>>, vector<1x128xf32>
    %4 = vector.broadcast %3 : vector<1x128xf32> to vector<162x128xf32>
    %5 = arith.addf %2, %4 : vector<162x128xf32>
    %cst_5 = arith.constant 0.000000e+00 : f32
    %6 = vector.broadcast %cst_5 : f32 to vector<162x128xf32>
    %7 = arith.cmpf oge, %5, %6 : vector<162x128xf32>
    %cst_6 = arith.constant 2.000000e-01 : f32
    %8 = vector.broadcast %cst_6 : f32 to vector<162x128xf32>
    %9 = arith.mulf %8, %5 : vector<162x128xf32>
    %10 = arith.select %7, %5, %9 : vector<162x128xi1>, vector<162x128xf32>
    %11 = arith.truncf %10 : vector<162x128xf32> to vector<162x128xbf16>
    %c0_7 = arith.constant 0 : index
    %c0_8 = arith.constant 0 : index
    %12 = vector.load %arg4[%c0_7, %c0_8] : memref<162x128xbf16, #tpu.memory_space<vmem>>, vector<162x128xbf16>
    tpu.vector_store %arg4[%c0_7, %c0_8], %11 {strides = array<i32>} : memref<162x128xbf16, #tpu.memory_space<vmem>>, vector<162x128xbf16>,
    return
  }
  func.func @transform_0(%arg0: i32) -> (i32, i32) {
    %c0_i32 = arith.constant 0 : i32
    %c0_i32_0 = arith.constant 0 : i32
    return %arg0, %c0_i32 : i32, i32
  }
  func.func @transform_1(%arg0: i32) -> (i32, i32) {
    %c0_i32 = arith.constant 0 : i32
    %c0_i32_0 = arith.constant 0 : i32
    %c0_i32_1 = arith.constant 0 : i32
    return %c0_i32, %c0_i32_0 : i32, i32
  }
  func.func @transform_2(%arg0: i32) -> (i32, i32) {
    %c0_i32 = arith.constant 0 : i32
    %c0_i32_0 = arith.constant 0 : i32
    %c0_i32_1 = arith.constant 0 : i32
    return %c0_i32, %c0_i32_0 : i32, i32
  }
  func.func @transform_3(%arg0: i32) -> (i32, i32) {
    %c0_i32 = arith.constant 0 : i32
    %c0_i32_0 = arith.constant 0 : i32
    return %arg0, %c0_i32 : i32, i32
  }
}

module attributes {stable_mosaic.version = 11 : i64} {
  func.func @_gemm_bias_act_kernel(%arg0: i32, %arg1: memref<50x128xbf16, #tpu.memory_space<vmem>>, %arg2: memref<128x128xbf16, #tpu.memory_space<vmem>>, %arg3: memref<1x128xf32, #tpu.memory_space<vmem>>, %arg4: memref<50x128xbf16, #tpu.memory_space<vmem>>) attributes {dimension_semantics = [#tpu.dimension_semantics<parallel>], iteration_bounds = array<i64: 1>, scalar_prefetch = 0 : i64, scratch_operands = 0 : i64, tpu.core_type = #tpu.core_type<tc>, window_params = [{transform_indices = @transform_0, window_bounds = array<i64: 50, 128>}, {pipeline_mode = #tpu.pipeline_mode<synchronous>, transform_indices = @transform_1, window_bounds = array<i64: 128, 128>}, {pipeline_mode = #tpu.pipeline_mode<synchronous>, transform_indices = @transform_2, window_bounds = array<i64: 1, 128>}, {transform_indices = @transform_3, window_bounds = array<i64: 50, 128>}]} {
    %c0 = arith.constant 0 : index
    %c0_0 = arith.constant 0 : index
    %0 = vector.load %arg1[%c0, %c0_0] : memref<50x128xbf16, #tpu.memory_space<vmem>>, vector<50x128xbf16>
    %c0_1 = arith.constant 0 : index
    %c0_2 = arith.constant 0 : index
    %1 = vector.load %arg2[%c0_1, %c0_2] : memref<128x128xbf16, #tpu.memory_space<vmem>>, vector<128x128xbf16>
    %cst = arith.constant dense<0.000000e+00> : vector<50x128xf32>
    %2 = tpu.matmul %0, %1, %cst {dimension_numbers = #tpu.dot_dimension_numbers<[1], [0], [0], [1], [0, 0, 1, 1], [], []>} : vector<50x128xbf16>, vector<128x128xbf16>, vector<50x128xf32> -> vector<50x128xf32>
    %c0_3 = arith.constant 0 : index
    %c0_4 = arith.constant 0 : index
    %3 = vector.load %arg3[%c0_3, %c0_4] : memref<1x128xf32, #tpu.memory_space<vmem>>, vector<1x128xf32>
    %4 = vector.broadcast %3 : vector<1x128xf32> to vector<50x128xf32>
    %5 = arith.addf %2, %4 : vector<50x128xf32>
    %cst_5 = arith.constant 0.000000e+00 : f32
    %6 = vector.broadcast %cst_5 : f32 to vector<50x128xf32>
    %7 = arith.cmpf oge, %5, %6 : vector<50x128xf32>
    %cst_6 = arith.constant 2.000000e-01 : f32
    %8 = vector.broadcast %cst_6 : f32 to vector<50x128xf32>
    %9 = arith.mulf %8, %5 : vector<50x128xf32>
    %10 = arith.select %7, %5, %9 : vector<50x128xi1>, vector<50x128xf32>
    %11 = arith.truncf %10 : vector<50x128xf32> to vector<50x128xbf16>
    %c0_7 = arith.constant 0 : index
    %c0_8 = arith.constant 0 : index
    %12 = vector.load %arg4[%c0_7, %c0_8] : memref<50x128xbf16, #tpu.memory_space<vmem>>, vector<50x128xbf16>
    tpu.vector_store %arg4[%c0_7, %c0_8], %11 {strides = array<i32>} : memref<50x128xbf16, #tpu.memory_space<vmem>>, vector<50x128xbf16>,
    return
  }
  func.func @transform_0(%arg0: i32) -> (i32, i32) {
    %c0_i32 = arith.constant 0 : i32
    %c0_i32_0 = arith.constant 0 : i32
    return %arg0, %c0_i32 : i32, i32
  }
  func.func @transform_1(%arg0: i32) -> (i32, i32) {
    %c0_i32 = arith.constant 0 : i32
    %c0_i32_0 = arith.constant 0 : i32
    %c0_i32_1 = arith.constant 0 : i32
    return %c0_i32, %c0_i32_0 : i32, i32
  }
  func.func @transform_2(%arg0: i32) -> (i32, i32) {
    %c0_i32 = arith.constant 0 : i32
    %c0_i32_0 = arith.constant 0 : i32
    %c0_i32_1 = arith.constant 0 : i32
    return %c0_i32, %c0_i32_0 : i32, i32
  }
  func.func @transform_3(%arg0: i32) -> (i32, i32) {
    %c0_i32 = arith.constant 0 : i32
    %c0_i32_0 = arith.constant 0 : i32
    return %arg0, %c0_i32 : i32, i32
  }
}

module attributes {stable_mosaic.version = 11 : i64} {
  func.func @_gemm_bias_act_kernel(%arg0: i32, %arg1: memref<18x256xbf16, #tpu.memory_space<vmem>>, %arg2: memref<256x128xbf16, #tpu.memory_space<vmem>>, %arg3: memref<1x128xf32, #tpu.memory_space<vmem>>, %arg4: memref<18x128xbf16, #tpu.memory_space<vmem>>) attributes {dimension_semantics = [#tpu.dimension_semantics<parallel>], iteration_bounds = array<i64: 1>, scalar_prefetch = 0 : i64, scratch_operands = 0 : i64, tpu.core_type = #tpu.core_type<tc>, window_params = [{transform_indices = @transform_0, window_bounds = array<i64: 18, 256>}, {pipeline_mode = #tpu.pipeline_mode<synchronous>, transform_indices = @transform_1, window_bounds = array<i64: 256, 128>}, {pipeline_mode = #tpu.pipeline_mode<synchronous>, transform_indices = @transform_2, window_bounds = array<i64: 1, 128>}, {transform_indices = @transform_3, window_bounds = array<i64: 18, 128>}]} {
    %c0 = arith.constant 0 : index
    %c0_0 = arith.constant 0 : index
    %0 = vector.load %arg1[%c0, %c0_0] : memref<18x256xbf16, #tpu.memory_space<vmem>>, vector<18x256xbf16>
    %c0_1 = arith.constant 0 : index
    %c0_2 = arith.constant 0 : index
    %1 = vector.load %arg2[%c0_1, %c0_2] : memref<256x128xbf16, #tpu.memory_space<vmem>>, vector<256x128xbf16>
    %cst = arith.constant dense<0.000000e+00> : vector<18x128xf32>
    %2 = tpu.matmul %0, %1, %cst {dimension_numbers = #tpu.dot_dimension_numbers<[1], [0], [0], [1], [0, 0, 1, 1], [], []>} : vector<18x256xbf16>, vector<256x128xbf16>, vector<18x128xf32> -> vector<18x128xf32>
    %c0_3 = arith.constant 0 : index
    %c0_4 = arith.constant 0 : index
    %3 = vector.load %arg3[%c0_3, %c0_4] : memref<1x128xf32, #tpu.memory_space<vmem>>, vector<1x128xf32>
    %4 = vector.broadcast %3 : vector<1x128xf32> to vector<18x128xf32>
    %5 = arith.addf %2, %4 : vector<18x128xf32>
    %cst_5 = arith.constant 0.000000e+00 : f32
    %6 = vector.broadcast %cst_5 : f32 to vector<18x128xf32>
    %7 = arith.cmpf oge, %5, %6 : vector<18x128xf32>
    %cst_6 = arith.constant 2.000000e-01 : f32
    %8 = vector.broadcast %cst_6 : f32 to vector<18x128xf32>
    %9 = arith.mulf %8, %5 : vector<18x128xf32>
    %10 = arith.select %7, %5, %9 : vector<18x128xi1>, vector<18x128xf32>
    %11 = arith.truncf %10 : vector<18x128xf32> to vector<18x128xbf16>
    %c0_7 = arith.constant 0 : index
    %c0_8 = arith.constant 0 : index
    %12 = vector.load %arg4[%c0_7, %c0_8] : memref<18x128xbf16, #tpu.memory_space<vmem>>, vector<18x128xbf16>
    tpu.vector_store %arg4[%c0_7, %c0_8], %11 {strides = array<i32>} : memref<18x128xbf16, #tpu.memory_space<vmem>>, vector<18x128xbf16>,
    return
  }
  func.func @transform_0(%arg0: i32) -> (i32, i32) {
    %c0_i32 = arith.constant 0 : i32
    %c0_i32_0 = arith.constant 0 : i32
    return %arg0, %c0_i32 : i32, i32
  }
  func.func @transform_1(%arg0: i32) -> (i32, i32) {
    %c0_i32 = arith.constant 0 : i32
    %c0_i32_0 = arith.constant 0 : i32
    %c0_i32_1 = arith.constant 0 : i32
    return %c0_i32, %c0_i32_0 : i32, i32
  }
  func.func @transform_2(%arg0: i32) -> (i32, i32) {
    %c0_i32 = arith.constant 0 : i32
    %c0_i32_0 = arith.constant 0 : i32
    %c0_i32_1 = arith.constant 0 : i32
    return %c0_i32, %c0_i32_0 : i32, i32
  }
  func.func @transform_3(%arg0: i32) -> (i32, i32) {
    %c0_i32 = arith.constant 0 : i32
    %c0_i32_0 = arith.constant 0 : i32
    return %arg0, %c0_i32 : i32, i32
  }
}

module attributes {stable_mosaic.version = 11 : i64} {
  func.func @_gemm_bias_act_kernel(%arg0: i32, %arg1: memref<32x512xbf16, #tpu.memory_space<vmem>>, %arg2: memref<512x128xbf16, #tpu.memory_space<vmem>>, %arg3: memref<1x128xf32, #tpu.memory_space<vmem>>, %arg4: memref<32x128xbf16, #tpu.memory_space<vmem>>) attributes {dimension_semantics = [#tpu.dimension_semantics<parallel>], iteration_bounds = array<i64: 1>, scalar_prefetch = 0 : i64, scratch_operands = 0 : i64, tpu.core_type = #tpu.core_type<tc>, window_params = [{transform_indices = @transform_0, window_bounds = array<i64: 32, 512>}, {pipeline_mode = #tpu.pipeline_mode<synchronous>, transform_indices = @transform_1, window_bounds = array<i64: 512, 128>}, {pipeline_mode = #tpu.pipeline_mode<synchronous>, transform_indices = @transform_2, window_bounds = array<i64: 1, 128>}, {transform_indices = @transform_3, window_bounds = array<i64: 32, 128>}]} {
    %c0 = arith.constant 0 : index
    %c0_0 = arith.constant 0 : index
    %0 = vector.load %arg1[%c0, %c0_0] : memref<32x512xbf16, #tpu.memory_space<vmem>>, vector<32x512xbf16>
    %c0_1 = arith.constant 0 : index
    %c0_2 = arith.constant 0 : index
    %1 = vector.load %arg2[%c0_1, %c0_2] : memref<512x128xbf16, #tpu.memory_space<vmem>>, vector<512x128xbf16>
    %cst = arith.constant dense<0.000000e+00> : vector<32x128xf32>
    %2 = tpu.matmul %0, %1, %cst {dimension_numbers = #tpu.dot_dimension_numbers<[1], [0], [0], [1], [0, 0, 1, 1], [], []>} : vector<32x512xbf16>, vector<512x128xbf16>, vector<32x128xf32> -> vector<32x128xf32>
    %c0_3 = arith.constant 0 : index
    %c0_4 = arith.constant 0 : index
    %3 = vector.load %arg3[%c0_3, %c0_4] : memref<1x128xf32, #tpu.memory_space<vmem>>, vector<1x128xf32>
    %4 = vector.broadcast %3 : vector<1x128xf32> to vector<32x128xf32>
    %5 = arith.addf %2, %4 : vector<32x128xf32>
    %cst_5 = arith.constant 0.000000e+00 : f32
    %6 = vector.broadcast %cst_5 : f32 to vector<32x128xf32>
    %7 = arith.cmpf oge, %5, %6 : vector<32x128xf32>
    %cst_6 = arith.constant 2.000000e-01 : f32
    %8 = vector.broadcast %cst_6 : f32 to vector<32x128xf32>
    %9 = arith.mulf %8, %5 : vector<32x128xf32>
    %10 = arith.select %7, %5, %9 : vector<32x128xi1>, vector<32x128xf32>
    %11 = arith.truncf %10 : vector<32x128xf32> to vector<32x128xbf16>
    %c0_7 = arith.constant 0 : index
    %c0_8 = arith.constant 0 : index
    %12 = vector.load %arg4[%c0_7, %c0_8] : memref<32x128xbf16, #tpu.memory_space<vmem>>, vector<32x128xbf16>
    tpu.vector_store %arg4[%c0_7, %c0_8], %11 {strides = array<i32>} : memref<32x128xbf16, #tpu.memory_space<vmem>>, vector<32x128xbf16>,
    return
  }
  func.func @transform_0(%arg0: i32) -> (i32, i32) {
    %c0_i32 = arith.constant 0 : i32
    %c0_i32_0 = arith.constant 0 : i32
    return %arg0, %c0_i32 : i32, i32
  }
  func.func @transform_1(%arg0: i32) -> (i32, i32) {
    %c0_i32 = arith.constant 0 : i32
    %c0_i32_0 = arith.constant 0 : i32
    %c0_i32_1 = arith.constant 0 : i32
    return %c0_i32, %c0_i32_0 : i32, i32
  }
  func.func @transform_2(%arg0: i32) -> (i32, i32) {
    %c0_i32 = arith.constant 0 : i32
    %c0_i32_0 = arith.constant 0 : i32
    %c0_i32_1 = arith.constant 0 : i32
    return %c0_i32, %c0_i32_0 : i32, i32
  }
  func.func @transform_3(%arg0: i32) -> (i32, i32) {
    %c0_i32 = arith.constant 0 : i32
    %c0_i32_0 = arith.constant 0 : i32
    return %arg0, %c0_i32 : i32, i32
  }
}

module attributes {stable_mosaic.version = 11 : i64} {
  func.func @_gemm_bias_act_kernel(%arg0: i32, %arg1: memref<50x1024xbf16, #tpu.memory_space<vmem>>, %arg2: memref<1024x128xbf16, #tpu.memory_space<vmem>>, %arg3: memref<1x128xf32, #tpu.memory_space<vmem>>, %arg4: memref<50x128xf32, #tpu.memory_space<vmem>>) attributes {dimension_semantics = [#tpu.dimension_semantics<parallel>], iteration_bounds = array<i64: 1>, scalar_prefetch = 0 : i64, scratch_operands = 0 : i64, tpu.core_type = #tpu.core_type<tc>, window_params = [{transform_indices = @transform_0, window_bounds = array<i64: 50, 1024>}, {pipeline_mode = #tpu.pipeline_mode<synchronous>, transform_indices = @transform_1, window_bounds = array<i64: 1024, 128>}, {pipeline_mode = #tpu.pipeline_mode<synchronous>, transform_indices = @transform_2, window_bounds = array<i64: 1, 128>}, {transform_indices = @transform_3, window_bounds = array<i64: 50, 128>}]} {
    %c0 = arith.constant 0 : index
    %c0_0 = arith.constant 0 : index
    %0 = vector.load %arg1[%c0, %c0_0] : memref<50x1024xbf16, #tpu.memory_space<vmem>>, vector<50x1024xbf16>
    %c0_1 = arith.constant 0 : index
    %c0_2 = arith.constant 0 : index
    %1 = vector.load %arg2[%c0_1, %c0_2] : memref<1024x128xbf16, #tpu.memory_space<vmem>>, vector<1024x128xbf16>
    %cst = arith.constant dense<0.000000e+00> : vector<50x128xf32>
    %2 = tpu.matmul %0, %1, %cst {dimension_numbers = #tpu.dot_dimension_numbers<[1], [0], [0], [1], [0, 0, 1, 1], [], []>} : vector<50x1024xbf16>, vector<1024x128xbf16>, vector<50x128xf32> -> vector<50x128xf32>
    %c0_3 = arith.constant 0 : index
    %c0_4 = arith.constant 0 : index
    %3 = vector.load %arg3[%c0_3, %c0_4] : memref<1x128xf32, #tpu.memory_space<vmem>>, vector<1x128xf32>
    %4 = vector.broadcast %3 : vector<1x128xf32> to vector<50x128xf32>
    %5 = arith.addf %2, %4 : vector<50x128xf32>
    %c0_5 = arith.constant 0 : index
    %c0_6 = arith.constant 0 : index
    %6 = vector.load %arg4[%c0_5, %c0_6] : memref<50x128xf32, #tpu.memory_space<vmem>>, vector<50x128xf32>
    tpu.vector_store %arg4[%c0_5, %c0_6], %5 {strides = array<i32>} : memref<50x128xf32, #tpu.memory_space<vmem>>, vector<50x128xf32>,
    return
  }
  func.func @transform_0(%arg0: i32) -> (i32, i32) {
    %c0_i32 = arith.constant 0 : i32
    %c0_i32_0 = arith.constant 0 : i32
    return %arg0, %c0_i32 : i32, i32
  }
  func.func @transform_1(%arg0: i32) -> (i32, i32) {
    %c0_i32 = arith.constant 0 : i32
    %c0_i32_0 = arith.constant 0 : i32
    %c0_i32_1 = arith.constant 0 : i32
    return %c0_i32, %c0_i32_0 : i32, i32
  }
  func.func @transform_2(%arg0: i32) -> (i32, i32) {
    %c0_i32 = arith.constant 0 : i32
    %c0_i32_0 = arith.constant 0 : i32
    %c0_i32_1 = arith.constant 0 : i32
    return %c0_i32, %c0_i32_0 : i32, i32
  }
  func.func @transform_3(%arg0: i32) -> (i32, i32) {
    %c0_i32 = arith.constant 0 : i32
    %c0_i32_0 = arith.constant 0 : i32
    return %arg0, %c0_i32 : i32, i32
  }
}

</mosaic_0001>

<llo_original>
// kernel: no_norm_discriminator_forward.5
$region0: #{no_norm_discriminator_forward.5}
  #allocation0 [shape = 'u32[]', space=smem, size = 0x4, offset = 0x4, fixed_abs, tag = 'smem constant byte address 0x4 - core index']
  #allocation1 [shape = 'u32[144,128]{1,0:T(1,128)}', space=vmem, size = 0x12000, scoped, tag = 'internal scratch']
  %s0 = inlined_call_operand.vmem [shape: bf16[162,128], index: 0, kind: input, shape index: {}]
  %s1 = inlined_call_operand.vmem [shape: bf16[128,128], index: 1, kind: input, shape index: {}]
  %s2 = inlined_call_operand.vmem [shape: f32[1,128], index: 2, kind: input, shape index: {}]
  %s3 = inlined_call_operand.vmem [shape: bf16[162,128], index: 3, kind: output, shape index: {}]
  %s4 = sld [smem:[#allocation0]]
  $region22: #{no_norm_discriminator_forward.5} parent=0
    _
  %s6 = ssub.s32 1, %s4
  %s7 = scalar_select 0, %s6, %s4
  // Predicated region
  $region2: #{no_norm_discriminator_forward.5} parent=0 // pred_check
    _
  $region3: #{no_norm_discriminator_forward.5} parent=0 // pred_check_branch
    %9 = sbr.rel (0) target = $region5
  $region4: #{no_norm_discriminator_forward.5} parent=0 // pred_region
    _
  $region5: #{no_norm_discriminator_forward.5} parent=0 // pred_fallthru
    _
  // Predicated region
  $region6: #{no_norm_discriminator_forward.5} parent=0 // pred_check
    _
  $region7: #{no_norm_discriminator_forward.5} parent=0 // pred_check_branch
    %11 = sbr.rel (0) target = $region9
  $region8: #{no_norm_discriminator_forward.5} parent=0 // pred_region
    _
  $region9: #{no_norm_discriminator_forward.5} parent=0 // pred_fallthru
    _
  // Predicated region
  $region10: #{no_norm_discriminator_forward.5} parent=0 // pred_check
    _
  $region11: #{no_norm_discriminator_forward.5} parent=0 // pred_check_branch
    %13 = sbr.rel (0) target = $region13
  $region12: #{no_norm_discriminator_forward.5} parent=0 // pred_region
    _
  $region13: #{no_norm_discriminator_forward.5} parent=0 // pred_fallthru
    _
  %v15 = vld [vmem:[%s0] sm:$0xf]
  %v16 = vld [vmem:[%s0 + $0x4] sm:$0xf]
  %v17 = vld [vmem:[%s0 + $0x8] sm:$0xf]
  %v18 = vld [vmem:[%s0 + $0xc] sm:$0xf]
  %v19 = vld [vmem:[%s0 + $0x10] sm:$0xf]
  %v20 = vld [vmem:[%s0 + $0x14] sm:$0xf]
  %v21 = vld [vmem:[%s0 + $0x18] sm:$0xf]
  %v22 = vld [vmem:[%s0 + $0x1c] sm:$0xf]
  %v23 = vld [vmem:[%s0 + $0x20] sm:$0xf]
  %v24 = vld [vmem:[%s0 + $0x24] sm:$0xf]
  %v25 = vld [vmem:[%s0 + $0x28] sm:$0xf]
  %v26 = vld [vmem:[%s0 + $0x2c] sm:$0xf]
  %v27 = vld [vmem:[%s0 + $0x30] sm:$0xf]
  %v28 = vld [vmem:[%s0 + $0x34] sm:$0xf]
  %v29 = vld [vmem:[%s0 + $0x38] sm:$0xf]
  %v30 = vld [vmem:[%s0 + $0x3c] sm:$0xf]
  %v31 = vld [vmem:[%s0 + $0x40] sm:$0xf]
  %v32 = vld [vmem:[%s0 + $0x44] sm:$0xf]
  %v33 = vld [vmem:[%s0 + $0x48] sm:$0xf]
  %v34 = vld [vmem:[%s0 + $0x4c] sm:$0xf]
  %v35 = vld [vmem:[%s0 + $0x50] sm:$0x1]
  %v36 = vld [vmem:[%s1] sm:$0xf]
  %v37 = vld [vmem:[%s1 + $0x4] sm:$0xf]
  %v38 = vld [vmem:[%s1 + $0x8] sm:$0xf]
  %v39 = vld [vmem:[%s1 + $0xc] sm:$0xf]
  %v40 = vld [vmem:[%s1 + $0x10] sm:$0xf]
  %v41 = vld [vmem:[%s1 + $0x14] sm:$0xf]
  %v42 = vld [vmem:[%s1 + $0x18] sm:$0xf]
  %v43 = vld [vmem:[%s1 + $0x1c] sm:$0xf]
  %v44 = vld [vmem:[%s1 + $0x20] sm:$0xf]
  %v45 = vld [vmem:[%s1 + $0x24] sm:$0xf]
  %v46 = vld [vmem:[%s1 + $0x28] sm:$0xf]
  %v47 = vld [vmem:[%s1 + $0x2c] sm:$0xf]
  %v48 = vld [vmem:[%s1 + $0x30] sm:$0xf]
  %v49 = vld [vmem:[%s1 + $0x34] sm:$0xf]
  %v50 = vld [vmem:[%s1 + $0x38] sm:$0xf]
  %v51 = vld [vmem:[%s1 + $0x3c] sm:$0xf]
  %v52 = vld [vmem:[%s2] sm:$0x1]
  %v54 = vlaneseq
  %v55 = vshrl.u32 %v54, 7
  %v56 = vsub.s32 0, %v55
  %v57 = vrot.slane %v52, %v56
  %v80 = vunpack.c.l.b16 %v15
  %v81 = vunpack.c.l.b16 %v16
  %v82 = vunpack.c.l.b16 %v17
  %v83 = vunpack.c.l.b16 %v18
  %v84 = vunpack.c.l.b16 %v19
  %v85 = vunpack.c.l.b16 %v20
  %v86 = vunpack.c.l.b16 %v21
  %v87 = vunpack.c.l.b16 %v22
  %v88 = vunpack.c.l.b16 %v23
  %v89 = vunpack.c.l.b16 %v24
  %v90 = vunpack.c.l.b16 %v25
  %v91 = vunpack.c.l.b16 %v26
  %v92 = vunpack.c.l.b16 %v27
  %v93 = vunpack.c.l.b16 %v28
  %v94 = vunpack.c.l.b16 %v29
  %v95 = vunpack.c.l.b16 %v30
  %v96 = vunpack.c.l.b16 %v31
  %v97 = vunpack.c.l.b16 %v32
  %v98 = vunpack.c.l.b16 %v33
  %v99 = vunpack.c.l.b16 %v34
  %v100 = vunpack.c.l.b16 %v35
  %v101 = vpack.c.b16 %v81, %v80
  %v102 = vpack.c.b16 %v83, %v82
  %v103 = vpack.c.b16 %v85, %v84
  %v104 = vpack.c.b16 %v87, %v86
  %v105 = vpack.c.b16 %v89, %v88
  %v106 = vpack.c.b16 %v91, %v90
  %v107 = vpack.c.b16 %v93, %v92
  %v108 = vpack.c.b16 %v95, %v94
  %v109 = vpack.c.b16 %v97, %v96
  %v110 = vpack.c.b16 %v99, %v98
  %v111 = vpack.c.b16 %v100, %v100
  %v139 = vunpack.c.l.b16 %v36
  %v140 = vunpack.c.l.b16 %v37
  %v141 = vunpack.c.l.b16 %v38
  %v142 = vunpack.c.l.b16 %v39
  %v143 = vunpack.c.l.b16 %v40
  %v144 = vunpack.c.l.b16 %v41
  %v145 = vunpack.c.l.b16 %v42
  %v146 = vunpack.c.l.b16 %v43
  %v147 = vunpack.c.l.b16 %v44
  %v148 = vunpack.c.l.b16 %v45
  %v149 = vunpack.c.l.b16 %v46
  %v150 = vunpack.c.l.b16 %v47
  %v151 = vunpack.c.l.b16 %v48
  %v152 = vunpack.c.l.b16 %v49
  %v153 = vunpack.c.l.b16 %v50
  %v154 = vunpack.c.l.b16 %v51
  %v155 = vpack.c.b16 %v140, %v139
  %v156 = vpack.c.b16 %v142, %v141
  %v157 = vpack.c.b16 %v144, %v143
  %v158 = vpack.c.b16 %v146, %v145
  %v159 = vpack.c.b16 %v148, %v147
  %v160 = vpack.c.b16 %v150, %v149
  %v161 = vpack.c.b16 %v152, %v151
  %v162 = vpack.c.b16 %v154, %v153
  %171 = vmatprep.subr.bf16.mxu0 0
  %172 = vmatpush1.bf16.msra.mxu0 %v155
  %173 = vmatprep.subr.bf16.mxu0 0
  %174 = vmatpush1.bf16.msra.mxu0 %v156
  %175 = vmatprep.subr.bf16.mxu0 0
  %176 = vmatpush1.bf16.msra.mxu0 %v157
  %177 = vmatprep.subr.bf16.mxu0 0
  %178 = vmatpush1.bf16.msra.mxu0 %v158
  %179 = vmatprep.subr.bf16.mxu0 0
  %180 = vmatpush1.bf16.msra.mxu0 %v159
  %181 = vmatprep.subr.bf16.mxu0 0
  %182 = vmatpush1.bf16.msra.mxu0 %v160
  %183 = vmatprep.subr.bf16.mxu0 0
  %184 = vmatpush1.bf16.msra.mxu0 %v161
  %185 = vmatprep.subr.bf16.mxu0 0
  %186 = vmatpush1.bf16.msra.mxu0 %v162
  %187 = vmatprep.subr.bf16.mxu0 0
  %188 = vmatpush1.bf16.msra.mxu0 0
  %189 = vmatprep.subr.bf16.mxu0 0
  %190 = vmatpush1.bf16.msra.mxu0 0
  %191 = vmatprep.subr.bf16.mxu0 0
  %192 = vmatpush1.bf16.msra.mxu0 0
  %193 = vmatprep.subr.bf16.mxu0 0
  %194 = vmatpush1.bf16.msra.mxu0 0
  %195 = vmatprep.subr.bf16.mxu0 0
  %196 = vmatpush1.bf16.msra.mxu0 0
  %197 = vmatprep.subr.bf16.mxu0 0
  %198 = vmatpush1.bf16.msra.mxu0 0
  %199 = vmatprep.subr.bf16.mxu0 0
  %200 = vmatpush1.bf16.msra.mxu0 0
  %201 = vmatprep.subr.bf16.mxu0 0
  %202 = vmatpush1.bf16.msra.mxu0 0
  %203 = vmatprep.mubr.bf16.mxu0 0
  %204 = vmatmul.mubr.bf16.gmra.mrb[0].mxu0 %v101
  %v205 = vpop.f32.mrb[0].mxu0
  %v206 = vadd.f32 %v57, %v205
  %v207 = vpop.f32.mrb[0].mxu0
  %v208 = vpop.f32.mrb[0].mxu0
  %v209 = vadd.f32 %v57, %v208
  %v210 = vpop.f32.mrb[0].mxu0
  %211 = vmatprep.mubr.bf16.mxu0 0
  %212 = vmatmul.mubr.bf16.gmra.mrb[0].mxu0 %v102
  %v213 = vpop.f32.mrb[0].mxu0
  %v214 = vadd.f32 %v57, %v213
  %v215 = vpop.f32.mrb[0].mxu0
  %v216 = vpop.f32.mrb[0].mxu0
  %v217 = vadd.f32 %v57, %v216
  %v218 = vpop.f32.mrb[0].mxu0
  %219 = vmatprep.mubr.bf16.mxu0 0
  %220 = vmatmul.mubr.bf16.gmra.mrb[0].mxu0 %v103
  %v221 = vpop.f32.mrb[0].mxu0
  %v222 = vadd.f32 %v57, %v221
  %v223 = vpop.f32.mrb[0].mxu0
  %v224 = vpop.f32.mrb[0].mxu0
  %v225 = vadd.f32 %v57, %v224
  %v226 = vpop.f32.mrb[0].mxu0
  %227 = vmatprep.mubr.bf16.mxu0 0
  %228 = vmatmul.mubr.bf16.gmra.mrb[0].mxu0 %v104
  %v229 = vpop.f32.mrb[0].mxu0
  %v230 = vadd.f32 %v57, %v229
  %v231 = vpop.f32.mrb[0].mxu0
  %v232 = vpop.f32.mrb[0].mxu0
  %v233 = vadd.f32 %v57, %v232
  %v234 = vpop.f32.mrb[0].mxu0
  %235 = vmatprep.mubr.bf16.mxu0 0
  %236 = vmatmul.mubr.bf16.gmra.mrb[0].mxu0 %v105
  %v237 = vpop.f32.mrb[0].mxu0
  %v238 = vadd.f32 %v57, %v237
  %v239 = vpop.f32.mrb[0].mxu0
  %v240 = vpop.f32.mrb[0].mxu0
  %v241 = vadd.f32 %v57, %v240
  %v242 = vpop.f32.mrb[0].mxu0
  %243 = vmatprep.mubr.bf16.mxu0 0
  %244 = vmatmul.mubr.bf16.gmra.mrb[0].mxu0 %v106
  %v245 = vpop.f32.mrb[0].mxu0
  %v246 = vadd.f32 %v57, %v245
  %v247 = vpop.f32.mrb[0].mxu0
  %v248 = vpop.f32.mrb[0].mxu0
  %v249 = vadd.f32 %v57, %v248
  %v250 = vpop.f32.mrb[0].mxu0
  %251 = vmatprep.mubr.bf16.mxu0 0
  %252 = vmatmul.mubr.bf16.gmra.mrb[0].mxu0 %v107
  %v253 = vpop.f32.mrb[0].mxu0
  %v254 = vadd.f32 %v57, %v253
  %v255 = vpop.f32.mrb[0].mxu0
  %v256 = vpop.f32.mrb[0].mxu0
  %v257 = vadd.f32 %v57, %v256
  %v258 = vpop.f32.mrb[0].mxu0
  %259 = vmatprep.mubr.bf16.mxu0 0
  %260 = vmatmul.mubr.bf16.gmra.mrb[0].mxu0 %v108
  %v261 = vpop.f32.mrb[0].mxu0
  %v262 = vadd.f32 %v57, %v261
  %v263 = vpop.f32.mrb[0].mxu0
  %v264 = vpop.f32.mrb[0].mxu0
  %v265 = vadd.f32 %v57, %v264
  %v266 = vpop.f32.mrb[0].mxu0
  %267 = vmatprep.mubr.bf16.mxu0 0
  %268 = vmatmul.mubr.bf16.gmra.mrb[0].mxu0 %v109
  %v269 = vpop.f32.mrb[0].mxu0
  %v270 = vadd.f32 %v57, %v269
  %v271 = vpop.f32.mrb[0].mxu0
  %v272 = vpop.f32.mrb[0].mxu0
  %v273 = vadd.f32 %v57, %v272
  %v274 = vpop.f32.mrb[0].mxu0
  %275 = vmatprep.mubr.bf16.mxu0 0
  %276 = vmatmul.mubr.bf16.gmra.mrb[0].mxu0 %v110
  %v277 = vpop.f32.mrb[0].mxu0
  %v278 = vadd.f32 %v57, %v277
  %v279 = vpop.f32.mrb[0].mxu0
  %v280 = vpop.f32.mrb[0].mxu0
  %v281 = vadd.f32 %v57, %v280
  %v282 = vpop.f32.mrb[0].mxu0
  %283 = vmatprep.mubr.bf16.mxu0 0
  %284 = vmatmul.mubr.bf16.gmra.mrb[0].mxu0 %v111
  %v285 = vpop.f32.mrb[0].mxu0
  %v286 = vadd.f32 %v57, %v285
  %v287 = vpop.f32.mrb[0].mxu0
  %v288 = vpop.f32.mrb[0].mxu0
  %v289 = vpop.f32.mrb[0].mxu0
  %290 = vdwg.mxu0
  %vm291 = vcmp.ge.f32.partialorder %v206, 0.0
  %vm292 = vcmp.ge.f32.partialorder %v209, 0.0
  %vm293 = vcmp.ge.f32.partialorder %v214, 0.0
  %vm294 = vcmp.ge.f32.partialorder %v217, 0.0
  %vm295 = vcmp.ge.f32.partialorder %v222, 0.0
  %vm296 = vcmp.ge.f32.partialorder %v225, 0.0
  %vm297 = vcmp.ge.f32.partialorder %v230, 0.0
  %vm298 = vcmp.ge.f32.partialorder %v233, 0.0
  %vm299 = vcmp.ge.f32.partialorder %v238, 0.0
  %vm300 = vcmp.ge.f32.partialorder %v241, 0.0
  %vm301 = vcmp.ge.f32.partialorder %v246, 0.0
  %vm302 = vcmp.ge.f32.partialorder %v249, 0.0
  %vm303 = vcmp.ge.f32.partialorder %v254, 0.0
  %vm304 = vcmp.ge.f32.partialorder %v257, 0.0
  %vm305 = vcmp.ge.f32.partialorder %v262, 0.0
  %vm306 = vcmp.ge.f32.partialorder %v265, 0.0
  %vm307 = vcmp.ge.f32.partialorder %v270, 0.0
  %vm308 = vcmp.ge.f32.partialorder %v273, 0.0
  %vm309 = vcmp.ge.f32.partialorder %v278, 0.0
  %vm310 = vcmp.ge.f32.partialorder %v281, 0.0
  %vm311 = vcmp.ge.f32.partialorder %v286, 0.0
  %v312 = vmul.f32 %v206, 0.2
  %v313 = vmul.f32 %v209, 0.2
  %v314 = vmul.f32 %v214, 0.2
  %v315 = vmul.f32 %v217, 0.2
  %v316 = vmul.f32 %v222, 0.2
  %v317 = vmul.f32 %v225, 0.2
  %v318 = vmul.f32 %v230, 0.2
  %v319 = vmul.f32 %v233, 0.2
  %v320 = vmul.f32 %v238, 0.2
  %v321 = vmul.f32 %v241, 0.2
  %v322 = vmul.f32 %v246, 0.2
  %v323 = vmul.f32 %v249, 0.2
  %v324 = vmul.f32 %v254, 0.2
  %v325 = vmul.f32 %v257, 0.2
  %v326 = vmul.f32 %v262, 0.2
  %v327 = vmul.f32 %v265, 0.2
  %v328 = vmul.f32 %v270, 0.2
  %v329 = vmul.f32 %v273, 0.2
  %v330 = vmul.f32 %v278, 0.2
  %v331 = vmul.f32 %v281, 0.2
  %v332 = vmul.f32 %v286, 0.2
  %v333 = vsel %vm291, %v206, %v312
  %v334 = vsel %vm292, %v209, %v313
  %v335 = vsel %vm293, %v214, %v314
  %v336 = vsel %vm294, %v217, %v315
  %v337 = vsel %vm295, %v222, %v316
  %v338 = vsel %vm296, %v225, %v317
  %v339 = vsel %vm297, %v230, %v318
  %v340 = vsel %vm298, %v233, %v319
  %v341 = vsel %vm299, %v238, %v320
  %v342 = vsel %vm300, %v241, %v321
  %v343 = vsel %vm301, %v246, %v322
  %v344 = vsel %vm302, %v249, %v323
  %v345 = vsel %vm303, %v254, %v324
  %v346 = vsel %vm304, %v257, %v325
  %v347 = vsel %vm305, %v262, %v326
  %v348 = vsel %vm306, %v265, %v327
  %v349 = vsel %vm307, %v270, %v328
  %v350 = vsel %vm308, %v273, %v329
  %v351 = vsel %vm309, %v278, %v330
  %v352 = vsel %vm310, %v281, %v331
  %v353 = vsel %vm311, %v286, %v332
  %v354 = vpack.c.bf16 %v334, %v333
  %v355 = vpack.c.bf16 %v336, %v335
  %v356 = vpack.c.bf16 %v338, %v337
  %v357 = vpack.c.bf16 %v340, %v339
  %v358 = vpack.c.bf16 %v342, %v341
  %v359 = vpack.c.bf16 %v344, %v343
  %v360 = vpack.c.bf16 %v346, %v345
  %v361 = vpack.c.bf16 %v348, %v347
  %v362 = vpack.c.bf16 %v350, %v349
  %v363 = vpack.c.bf16 %v352, %v351
  %v364 = vpack.c.bf16 %v353, %v353
  %v376 = vunpack.c.l.b16 %v354
  %v377 = vunpack.c.h.b16 %v354
  %v378 = vunpack.c.l.b16 %v355
  %v379 = vunpack.c.h.b16 %v355
  %v380 = vunpack.c.l.b16 %v356
  %v381 = vunpack.c.h.b16 %v356
  %v382 = vunpack.c.l.b16 %v357
  %v383 = vunpack.c.h.b16 %v357
  %v384 = vunpack.c.l.b16 %v358
  %v385 = vunpack.c.h.b16 %v358
  %v386 = vunpack.c.l.b16 %v359
  %v387 = vunpack.c.h.b16 %v359
  %v388 = vunpack.c.l.b16 %v360
  %v389 = vunpack.c.h.b16 %v360
  %v390 = vunpack.c.l.b16 %v361
  %v391 = vunpack.c.h.b16 %v361
  %v392 = vunpack.c.l.b16 %v362
  %v393 = vunpack.c.h.b16 %v362
  %v394 = vunpack.c.l.b16 %v363
  %v395 = vunpack.c.h.b16 %v363
  %v396 = vunpack.c.l.b16 %v364
  %v397 = vpack.c.b16 %v376, %v376
  %v398 = vpack.c.b16 %v377, %v377
  %v399 = vpack.c.b16 %v378, %v378
  %v400 = vpack.c.b16 %v379, %v379
  %v401 = vpack.c.b16 %v380, %v380
  %v402 = vpack.c.b16 %v381, %v381
  %v403 = vpack.c.b16 %v382, %v382
  %v404 = vpack.c.b16 %v383, %v383
  %v405 = vpack.c.b16 %v384, %v384
  %v406 = vpack.c.b16 %v385, %v385
  %v407 = vpack.c.b16 %v386, %v386
  %v408 = vpack.c.b16 %v387, %v387
  %v409 = vpack.c.b16 %v388, %v388
  %v410 = vpack.c.b16 %v389, %v389
  %v411 = vpack.c.b16 %v390, %v390
  %v412 = vpack.c.b16 %v391, %v391
  %v413 = vpack.c.b16 %v392, %v392
  %v414 = vpack.c.b16 %v393, %v393
  %v415 = vpack.c.b16 %v394, %v394
  %v416 = vpack.c.b16 %v395, %v395
  %v417 = vpack.c.b16 %v396, %v396
  %439 = vst [vmem:[%s3] sm:$0xf] %v397
  %440 = vst [vmem:[%s3 + $0x4] sm:$0xf] %v398
  %441 = vst [vmem:[%s3 + $0x8] sm:$0xf] %v399
  %442 = vst [vmem:[%s3 + $0xc] sm:$0xf] %v400
  %443 = vst [vmem:[%s3 + $0x10] sm:$0xf] %v401
  %444 = vst [vmem:[%s3 + $0x14] sm:$0xf] %v402
  %445 = vst [vmem:[%s3 + $0x18] sm:$0xf] %v403
  %446 = vst [vmem:[%s3 + $0x1c] sm:$0xf] %v404
  %447 = vst [vmem:[%s3 + $0x20] sm:$0xf] %v405
  %448 = vst [vmem:[%s3 + $0x24] sm:$0xf] %v406
  %449 = vst [vmem:[%s3 + $0x28] sm:$0xf] %v407
  %450 = vst [vmem:[%s3 + $0x2c] sm:$0xf] %v408
  %451 = vst [vmem:[%s3 + $0x30] sm:$0xf] %v409
  %452 = vst [vmem:[%s3 + $0x34] sm:$0xf] %v410
  %453 = vst [vmem:[%s3 + $0x38] sm:$0xf] %v411
  %454 = vst [vmem:[%s3 + $0x3c] sm:$0xf] %v412
  %455 = vst [vmem:[%s3 + $0x40] sm:$0xf] %v413
  %456 = vst [vmem:[%s3 + $0x44] sm:$0xf] %v414
  %457 = vst [vmem:[%s3 + $0x48] sm:$0xf] %v415
  %458 = vst [vmem:[%s3 + $0x4c] sm:$0xf] %v416
  %459 = vst [vmem:[%s3 + $0x50] sm:$0x1] %v417
  // Predicated region
  $region14: #{no_norm_discriminator_forward.5} parent=0 // pred_check
    _
  $region15: #{no_norm_discriminator_forward.5} parent=0 // pred_check_branch
    %461 = sbr.rel (0) target = $region17
  $region16: #{no_norm_discriminator_forward.5} parent=0 // pred_region
    _
  $region17: #{no_norm_discriminator_forward.5} parent=0 // pred_fallthru
    _
  // Predicated region
  $region18: #{no_norm_discriminator_forward.5} parent=0 // pred_check
    _
  $region19: #{no_norm_discriminator_forward.5} parent=0 // pred_check_branch
    %463 = sbr.rel (0) target = $region21
  $region20: #{no_norm_discriminator_forward.5} parent=0 // pred_region
    _
  $region21: #{no_norm_discriminator_forward.5} parent=0 // pred_fallthru
    _

// kernel: no_norm_discriminator_forward.6
$region0: #{no_norm_discriminator_forward.6}
  #allocation0 [shape = 'u32[]', space=smem, size = 0x4, offset = 0x4, fixed_abs, tag = 'smem constant byte address 0x4 - core index']
  #allocation1 [shape = 'u32[144,128]{1,0:T(1,128)}', space=vmem, size = 0x12000, scoped, tag = 'internal scratch']
  %s0 = inlined_call_operand.vmem [shape: bf16[50,128], index: 0, kind: input, shape index: {}]
  %s1 = inlined_call_operand.vmem [shape: bf16[128,128], index: 1, kind: input, shape index: {}]
  %s2 = inlined_call_operand.vmem [shape: f32[1,128], index: 2, kind: input, shape index: {}]
  %s3 = inlined_call_operand.vmem [shape: bf16[50,128], index: 3, kind: output, shape index: {}]
  %s4 = sld [smem:[#allocation0]]
  $region22: #{no_norm_discriminator_forward.6} parent=0
    _
  %s6 = ssub.s32 1, %s4
  %s7 = scalar_select 0, %s6, %s4
  // Predicated region
  $region2: #{no_norm_discriminator_forward.6} parent=0 // pred_check
    _
  $region3: #{no_norm_discriminator_forward.6} parent=0 // pred_check_branch
    %9 = sbr.rel (0) target = $region5
  $region4: #{no_norm_discriminator_forward.6} parent=0 // pred_region
    _
  $region5: #{no_norm_discriminator_forward.6} parent=0 // pred_fallthru
    _
  // Predicated region
  $region6: #{no_norm_discriminator_forward.6} parent=0 // pred_check
    _
  $region7: #{no_norm_discriminator_forward.6} parent=0 // pred_check_branch
    %11 = sbr.rel (0) target = $region9
  $region8: #{no_norm_discriminator_forward.6} parent=0 // pred_region
    _
  $region9: #{no_norm_discriminator_forward.6} parent=0 // pred_fallthru
    _
  // Predicated region
  $region10: #{no_norm_discriminator_forward.6} parent=0 // pred_check
    _
  $region11: #{no_norm_discriminator_forward.6} parent=0 // pred_check_branch
    %13 = sbr.rel (0) target = $region13
  $region12: #{no_norm_discriminator_forward.6} parent=0 // pred_region
    _
  $region13: #{no_norm_discriminator_forward.6} parent=0 // pred_fallthru
    _
  %v15 = vld [vmem:[%s0] sm:$0xf]
  %v16 = vld [vmem:[%s0 + $0x4] sm:$0xf]
  %v17 = vld [vmem:[%s0 + $0x8] sm:$0xf]
  %v18 = vld [vmem:[%s0 + $0xc] sm:$0xf]
  %v19 = vld [vmem:[%s0 + $0x10] sm:$0xf]
  %v20 = vld [vmem:[%s0 + $0x14] sm:$0xf]
  %v21 = vld [vmem:[%s0 + $0x18] sm:$0x1]
  %v22 = vld [vmem:[%s1] sm:$0xf]
  %v23 = vld [vmem:[%s1 + $0x4] sm:$0xf]
  %v24 = vld [vmem:[%s1 + $0x8] sm:$0xf]
  %v25 = vld [vmem:[%s1 + $0xc] sm:$0xf]
  %v26 = vld [vmem:[%s1 + $0x10] sm:$0xf]
  %v27 = vld [vmem:[%s1 + $0x14] sm:$0xf]
  %v28 = vld [vmem:[%s1 + $0x18] sm:$0xf]
  %v29 = vld [vmem:[%s1 + $0x1c] sm:$0xf]
  %v30 = vld [vmem:[%s1 + $0x20] sm:$0xf]
  %v31 = vld [vmem:[%s1 + $0x24] sm:$0xf]
  %v32 = vld [vmem:[%s1 + $0x28] sm:$0xf]
  %v33 = vld [vmem:[%s1 + $0x2c] sm:$0xf]
  %v34 = vld [vmem:[%s1 + $0x30] sm:$0xf]
  %v35 = vld [vmem:[%s1 + $0x34] sm:$0xf]
  %v36 = vld [vmem:[%s1 + $0x38] sm:$0xf]
  %v37 = vld [vmem:[%s1 + $0x3c] sm:$0xf]
  %v38 = vld [vmem:[%s2] sm:$0x1]
  %v40 = vlaneseq
  %v41 = vshrl.u32 %v40, 7
  %v42 = vsub.s32 0, %v41
  %v43 = vrot.slane %v38, %v42
  %v52 = vunpack.c.l.b16 %v15
  %v53 = vunpack.c.l.b16 %v16
  %v54 = vunpack.c.l.b16 %v17
  %v55 = vunpack.c.l.b16 %v18
  %v56 = vunpack.c.l.b16 %v19
  %v57 = vunpack.c.l.b16 %v20
  %v58 = vunpack.c.l.b16 %v21
  %v59 = vpack.c.b16 %v53, %v52
  %v60 = vpack.c.b16 %v55, %v54
  %v61 = vpack.c.b16 %v57, %v56
  %v62 = vpack.c.b16 %v58, %v58
  %v83 = vunpack.c.l.b16 %v22
  %v84 = vunpack.c.l.b16 %v23
  %v85 = vunpack.c.l.b16 %v24
  %v86 = vunpack.c.l.b16 %v25
  %v87 = vunpack.c.l.b16 %v26
  %v88 = vunpack.c.l.b16 %v27
  %v89 = vunpack.c.l.b16 %v28
  %v90 = vunpack.c.l.b16 %v29
  %v91 = vunpack.c.l.b16 %v30
  %v92 = vunpack.c.l.b16 %v31
  %v93 = vunpack.c.l.b16 %v32
  %v94 = vunpack.c.l.b16 %v33
  %v95 = vunpack.c.l.b16 %v34
  %v96 = vunpack.c.l.b16 %v35
  %v97 = vunpack.c.l.b16 %v36
  %v98 = vunpack.c.l.b16 %v37
  %v99 = vpack.c.b16 %v84, %v83
  %v100 = vpack.c.b16 %v86, %v85
  %v101 = vpack.c.b16 %v88, %v87
  %v102 = vpack.c.b16 %v90, %v89
  %v103 = vpack.c.b16 %v92, %v91
  %v104 = vpack.c.b16 %v94, %v93
  %v105 = vpack.c.b16 %v96, %v95
  %v106 = vpack.c.b16 %v98, %v97
  %115 = vmatprep.subr.bf16.mxu0 0
  %116 = vmatpush1.bf16.msra.mxu0 %v99
  %117 = vmatprep.subr.bf16.mxu0 0
  %118 = vmatpush1.bf16.msra.mxu0 %v100
  %119 = vmatprep.subr.bf16.mxu0 0
  %120 = vmatpush1.bf16.msra.mxu0 %v101
  %121 = vmatprep.subr.bf16.mxu0 0
  %122 = vmatpush1.bf16.msra.mxu0 %v102
  %123 = vmatprep.subr.bf16.mxu0 0
  %124 = vmatpush1.bf16.msra.mxu0 %v103
  %125 = vmatprep.subr.bf16.mxu0 0
  %126 = vmatpush1.bf16.msra.mxu0 %v104
  %127 = vmatprep.subr.bf16.mxu0 0
  %128 = vmatpush1.bf16.msra.mxu0 %v105
  %129 = vmatprep.subr.bf16.mxu0 0
  %130 = vmatpush1.bf16.msra.mxu0 %v106
  %131 = vmatprep.subr.bf16.mxu0 0
  %132 = vmatpush1.bf16.msra.mxu0 0
  %133 = vmatprep.subr.bf16.mxu0 0
  %134 = vmatpush1.bf16.msra.mxu0 0
  %135 = vmatprep.subr.bf16.mxu0 0
  %136 = vmatpush1.bf16.msra.mxu0 0
  %137 = vmatprep.subr.bf16.mxu0 0
  %138 = vmatpush1.bf16.msra.mxu0 0
  %139 = vmatprep.subr.bf16.mxu0 0
  %140 = vmatpush1.bf16.msra.mxu0 0
  %141 = vmatprep.subr.bf16.mxu0 0
  %142 = vmatpush1.bf16.msra.mxu0 0
  %143 = vmatprep.subr.bf16.mxu0 0
  %144 = vmatpush1.bf16.msra.mxu0 0
  %145 = vmatprep.subr.bf16.mxu0 0
  %146 = vmatpush1.bf16.msra.mxu0 0
  %147 = vmatprep.mubr.bf16.mxu0 0
  %148 = vmatmul.mubr.bf16.gmra.mrb[0].mxu0 %v59
  %v149 = vpop.f32.mrb[0].mxu0
  %v150 = vadd.f32 %v43, %v149
  %v151 = vpop.f32.mrb[0].mxu0
  %v152 = vpop.f32.mrb[0].mxu0
  %v153 = vadd.f32 %v43, %v152
  %v154 = vpop.f32.mrb[0].mxu0
  %155 = vmatprep.mubr.bf16.mxu0 0
  %156 = vmatmul.mubr.bf16.gmra.mrb[0].mxu0 %v60
  %v157 = vpop.f32.mrb[0].mxu0
  %v158 = vadd.f32 %v43, %v157
  %v159 = vpop.f32.mrb[0].mxu0
  %v160 = vpop.f32.mrb[0].mxu0
  %v161 = vadd.f32 %v43, %v160
  %v162 = vpop.f32.mrb[0].mxu0
  %163 = vmatprep.mubr.bf16.mxu0 0
  %164 = vmatmul.mubr.bf16.gmra.mrb[0].mxu0 %v61
  %v165 = vpop.f32.mrb[0].mxu0
  %v166 = vadd.f32 %v43, %v165
  %v167 = vpop.f32.mrb[0].mxu0
  %v168 = vpop.f32.mrb[0].mxu0
  %v169 = vadd.f32 %v43, %v168
  %v170 = vpop.f32.mrb[0].mxu0
  %171 = vmatprep.mubr.bf16.mxu0 0
  %172 = vmatmul.mubr.bf16.gmra.mrb[0].mxu0 %v62
  %v173 = vpop.f32.mrb[0].mxu0
  %v174 = vadd.f32 %v43, %v173
  %v175 = vpop.f32.mrb[0].mxu0
  %v176 = vpop.f32.mrb[0].mxu0
  %v177 = vpop.f32.mrb[0].mxu0
  %178 = vdwg.mxu0
  %vm179 = vcmp.ge.f32.partialorder %v150, 0.0
  %vm180 = vcmp.ge.f32.partialorder %v153, 0.0
  %vm181 = vcmp.ge.f32.partialorder %v158, 0.0
  %vm182 = vcmp.ge.f32.partialorder %v161, 0.0
  %vm183 = vcmp.ge.f32.partialorder %v166, 0.0
  %vm184 = vcmp.ge.f32.partialorder %v169, 0.0
  %vm185 = vcmp.ge.f32.partialorder %v174, 0.0
  %v186 = vmul.f32 %v150, 0.2
  %v187 = vmul.f32 %v153, 0.2
  %v188 = vmul.f32 %v158, 0.2
  %v189 = vmul.f32 %v161, 0.2
  %v190 = vmul.f32 %v166, 0.2
  %v191 = vmul.f32 %v169, 0.2
  %v192 = vmul.f32 %v174, 0.2
  %v193 = vsel %vm179, %v150, %v186
  %v194 = vsel %vm180, %v153, %v187
  %v195 = vsel %vm181, %v158, %v188
  %v196 = vsel %vm182, %v161, %v189
  %v197 = vsel %vm183, %v166, %v190
  %v198 = vsel %vm184, %v169, %v191
  %v199 = vsel %vm185, %v174, %v192
  %v200 = vpack.c.bf16 %v194, %v193
  %v201 = vpack.c.bf16 %v196, %v195
  %v202 = vpack.c.bf16 %v198, %v197
  %v203 = vpack.c.bf16 %v199, %v199
  %v208 = vunpack.c.l.b16 %v200
  %v209 = vunpack.c.h.b16 %v200
  %v210 = vunpack.c.l.b16 %v201
  %v211 = vunpack.c.h.b16 %v201
  %v212 = vunpack.c.l.b16 %v202
  %v213 = vunpack.c.h.b16 %v202
  %v214 = vunpack.c.l.b16 %v203
  %v215 = vpack.c.b16 %v208, %v208
  %v216 = vpack.c.b16 %v209, %v209
  %v217 = vpack.c.b16 %v210, %v210
  %v218 = vpack.c.b16 %v211, %v211
  %v219 = vpack.c.b16 %v212, %v212
  %v220 = vpack.c.b16 %v213, %v213
  %v221 = vpack.c.b16 %v214, %v214
  %229 = vst [vmem:[%s3] sm:$0xf] %v215
  %230 = vst [vmem:[%s3 + $0x4] sm:$0xf] %v216
  %231 = vst [vmem:[%s3 + $0x8] sm:$0xf] %v217
  %232 = vst [vmem:[%s3 + $0xc] sm:$0xf] %v218
  %233 = vst [vmem:[%s3 + $0x10] sm:$0xf] %v219
  %234 = vst [vmem:[%s3 + $0x14] sm:$0xf] %v220
  %235 = vst [vmem:[%s3 + $0x18] sm:$0x1] %v221
  // Predicated region
  $region14: #{no_norm_discriminator_forward.6} parent=0 // pred_check
    _
  $region15: #{no_norm_discriminator_forward.6} parent=0 // pred_check_branch
    %237 = sbr.rel (0) target = $region17
  $region16: #{no_norm_discriminator_forward.6} parent=0 // pred_region
    _
  $region17: #{no_norm_discriminator_forward.6} parent=0 // pred_fallthru
    _
  // Predicated region
  $region18: #{no_norm_discriminator_forward.6} parent=0 // pred_check
    _
  $region19: #{no_norm_discriminator_forward.6} parent=0 // pred_check_branch
    %239 = sbr.rel (0) target = $region21
  $region20: #{no_norm_discriminator_forward.6} parent=0 // pred_region
    _
  $region21: #{no_norm_discriminator_forward.6} parent=0 // pred_fallthru
    _

// kernel: no_norm_discriminator_forward.7
$region0: #{no_norm_discriminator_forward.7}
  #allocation0 [shape = 'u32[]', space=smem, size = 0x4, offset = 0x4, fixed_abs, tag = 'smem constant byte address 0x4 - core index']
  #allocation1 [shape = 'u32[144,128]{1,0:T(1,128)}', space=vmem, size = 0x12000, scoped, tag = 'internal scratch']
  %s0 = inlined_call_operand.vmem [shape: bf16[18,256], index: 0, kind: input, shape index: {}]
  %s1 = inlined_call_operand.vmem [shape: bf16[256,128], index: 1, kind: input, shape index: {}]
  %s2 = inlined_call_operand.vmem [shape: f32[1,128], index: 2, kind: input, shape index: {}]
  %s3 = inlined_call_operand.vmem [shape: bf16[18,128], index: 3, kind: output, shape index: {}]
  %s4 = sld [smem:[#allocation0]]
  $region22: #{no_norm_discriminator_forward.7} parent=0
    _
  %s6 = ssub.s32 1, %s4
  %s7 = scalar_select 0, %s6, %s4
  // Predicated region
  $region2: #{no_norm_discriminator_forward.7} parent=0 // pred_check
    _
  $region3: #{no_norm_discriminator_forward.7} parent=0 // pred_check_branch
    %9 = sbr.rel (0) target = $region5
  $region4: #{no_norm_discriminator_forward.7} parent=0 // pred_region
    _
  $region5: #{no_norm_discriminator_forward.7} parent=0 // pred_fallthru
    _
  // Predicated region
  $region6: #{no_norm_discriminator_forward.7} parent=0 // pred_check
    _
  $region7: #{no_norm_discriminator_forward.7} parent=0 // pred_check_branch
    %11 = sbr.rel (0) target = $region9
  $region8: #{no_norm_discriminator_forward.7} parent=0 // pred_region
    _
  $region9: #{no_norm_discriminator_forward.7} parent=0 // pred_fallthru
    _
  // Predicated region
  $region10: #{no_norm_discriminator_forward.7} parent=0 // pred_check
    _
  $region11: #{no_norm_discriminator_forward.7} parent=0 // pred_check_branch
    %13 = sbr.rel (0) target = $region13
  $region12: #{no_norm_discriminator_forward.7} parent=0 // pred_region
    _
  $region13: #{no_norm_discriminator_forward.7} parent=0 // pred_fallthru
    _
  %v15 = vld [vmem:[%s0] sm:$0xff]
  %v16 = vld [vmem:[%s0 + $0x8] sm:$0xff]
  %v17 = vld [vmem:[%s0 + $0x10] sm:$0x11]
  %v18 = vld [vmem:[%s1] sm:$0xf]
  %v19 = vld [vmem:[%s1 + $0x4] sm:$0xf]
  %v20 = vld [vmem:[%s1 + $0x8] sm:$0xf]
  %v21 = vld [vmem:[%s1 + $0xc] sm:$0xf]
  %v22 = vld [vmem:[%s1 + $0x10] sm:$0xf]
  %v23 = vld [vmem:[%s1 + $0x14] sm:$0xf]
  %v24 = vld [vmem:[%s1 + $0x18] sm:$0xf]
  %v25 = vld [vmem:[%s1 + $0x1c] sm:$0xf]
  %v26 = vld [vmem:[%s1 + $0x20] sm:$0xf]
  %v27 = vld [vmem:[%s1 + $0x24] sm:$0xf]
  %v28 = vld [vmem:[%s1 + $0x28] sm:$0xf]
  %v29 = vld [vmem:[%s1 + $0x2c] sm:$0xf]
  %v30 = vld [vmem:[%s1 + $0x30] sm:$0xf]
  %v31 = vld [vmem:[%s1 + $0x34] sm:$0xf]
  %v32 = vld [vmem:[%s1 + $0x38] sm:$0xf]
  %v33 = vld [vmem:[%s1 + $0x3c] sm:$0xf]
  %v34 = vld [vmem:[%s1 + $0x40] sm:$0xf]
  %v35 = vld [vmem:[%s1 + $0x44] sm:$0xf]
  %v36 = vld [vmem:[%s1 + $0x48] sm:$0xf]
  %v37 = vld [vmem:[%s1 + $0x4c] sm:$0xf]
  %v38 = vld [vmem:[%s1 + $0x50] sm:$0xf]
  %v39 = vld [vmem:[%s1 + $0x54] sm:$0xf]
  %v40 = vld [vmem:[%s1 + $0x58] sm:$0xf]
  %v41 = vld [vmem:[%s1 + $0x5c] sm:$0xf]
  %v42 = vld [vmem:[%s1 + $0x60] sm:$0xf]
  %v43 = vld [vmem:[%s1 + $0x64] sm:$0xf]
  %v44 = vld [vmem:[%s1 + $0x68] sm:$0xf]
  %v45 = vld [vmem:[%s1 + $0x6c] sm:$0xf]
  %v46 = vld [vmem:[%s1 + $0x70] sm:$0xf]
  %v47 = vld [vmem:[%s1 + $0x74] sm:$0xf]
  %v48 = vld [vmem:[%s1 + $0x78] sm:$0xf]
  %v49 = vld [vmem:[%s1 + $0x7c] sm:$0xf]
  %v50 = vld [vmem:[%s2] sm:$0x1]
  %v52 = vlaneseq
  %v53 = vshrl.u32 %v52, 7
  %v54 = vsub.s32 0, %v53
  %v55 = vrot.slane %v50, %v54
  %v60 = vunpack.c.l.b16 %v15
  %v61 = vunpack.c.h.b16 %v15
  %v62 = vunpack.c.l.b16 %v16
  %v63 = vunpack.c.h.b16 %v16
  %v64 = vunpack.c.l.b16 %v17
  %v65 = vunpack.c.h.b16 %v17
  %v66 = vpack.c.b16 %v62, %v60
  %v67 = vpack.c.b16 %v63, %v61
  %v68 = vpack.c.b16 %v64, %v64
  %v69 = vpack.c.b16 %v65, %v65
  %v106 = vunpack.c.l.b16 %v18
  %v107 = vunpack.c.l.b16 %v19
  %v108 = vunpack.c.l.b16 %v20
  %v109 = vunpack.c.l.b16 %v21
  %v110 = vunpack.c.l.b16 %v22
  %v111 = vunpack.c.l.b16 %v23
  %v112 = vunpack.c.l.b16 %v24
  %v113 = vunpack.c.l.b16 %v25
  %v114 = vunpack.c.l.b16 %v26
  %v115 = vunpack.c.l.b16 %v27
  %v116 = vunpack.c.l.b16 %v28
  %v117 = vunpack.c.l.b16 %v29
  %v118 = vunpack.c.l.b16 %v30
  %v119 = vunpack.c.l.b16 %v31
  %v120 = vunpack.c.l.b16 %v32
  %v121 = vunpack.c.l.b16 %v33
  %v122 = vunpack.c.l.b16 %v34
  %v123 = vunpack.c.l.b16 %v35
  %v124 = vunpack.c.l.b16 %v36
  %v125 = vunpack.c.l.b16 %v37
  %v126 = vunpack.c.l.b16 %v38
  %v127 = vunpack.c.l.b16 %v39
  %v128 = vunpack.c.l.b16 %v40
  %v129 = vunpack.c.l.b16 %v41
  %v130 = vunpack.c.l.b16 %v42
  %v131 = vunpack.c.l.b16 %v43
  %v132 = vunpack.c.l.b16 %v44
  %v133 = vunpack.c.l.b16 %v45
  %v134 = vunpack.c.l.b16 %v46
  %v135 = vunpack.c.l.b16 %v47
  %v136 = vunpack.c.l.b16 %v48
  %v137 = vunpack.c.l.b16 %v49
  %v138 = vpack.c.b16 %v107, %v106
  %v139 = vpack.c.b16 %v109, %v108
  %v140 = vpack.c.b16 %v111, %v110
  %v141 = vpack.c.b16 %v113, %v112
  %v142 = vpack.c.b16 %v115, %v114
  %v143 = vpack.c.b16 %v117, %v116
  %v144 = vpack.c.b16 %v119, %v118
  %v145 = vpack.c.b16 %v121, %v120
  %v146 = vpack.c.b16 %v123, %v122
  %v147 = vpack.c.b16 %v125, %v124
  %v148 = vpack.c.b16 %v127, %v126
  %v149 = vpack.c.b16 %v129, %v128
  %v150 = vpack.c.b16 %v131, %v130
  %v151 = vpack.c.b16 %v133, %v132
  %v152 = vpack.c.b16 %v135, %v134
  %v153 = vpack.c.b16 %v137, %v136
  %170 = vmatprep.subr.bf16.mxu0 0
  %171 = vmatpush1.bf16.msra.mxu0 %v138
  %172 = vmatprep.subr.bf16.mxu0 0
  %173 = vmatpush1.bf16.msra.mxu0 %v139
  %174 = vmatprep.subr.bf16.mxu0 0
  %175 = vmatpush1.bf16.msra.mxu0 %v140
  %176 = vmatprep.subr.bf16.mxu0 0
  %177 = vmatpush1.bf16.msra.mxu0 %v141
  %178 = vmatprep.subr.bf16.mxu0 0
  %179 = vmatpush1.bf16.msra.mxu0 %v142
  %180 = vmatprep.subr.bf16.mxu0 0
  %181 = vmatpush1.bf16.msra.mxu0 %v143
  %182 = vmatprep.subr.bf16.mxu0 0
  %183 = vmatpush1.bf16.msra.mxu0 %v144
  %184 = vmatprep.subr.bf16.mxu0 0
  %185 = vmatpush1.bf16.msra.mxu0 %v145
  %186 = vmatprep.subr.bf16.mxu0 0
  %187 = vmatpush1.bf16.msra.mxu0 %v146
  %188 = vmatprep.subr.bf16.mxu0 0
  %189 = vmatpush1.bf16.msra.mxu0 %v147
  %190 = vmatprep.subr.bf16.mxu0 0
  %191 = vmatpush1.bf16.msra.mxu0 %v148
  %192 = vmatprep.subr.bf16.mxu0 0
  %193 = vmatpush1.bf16.msra.mxu0 %v149
  %194 = vmatprep.subr.bf16.mxu0 0
  %195 = vmatpush1.bf16.msra.mxu0 %v150
  %196 = vmatprep.subr.bf16.mxu0 0
  %197 = vmatpush1.bf16.msra.mxu0 %v151
  %198 = vmatprep.subr.bf16.mxu0 0
  %199 = vmatpush1.bf16.msra.mxu0 %v152
  %200 = vmatprep.subr.bf16.mxu0 0
  %201 = vmatpush1.bf16.msra.mxu0 %v153
  %202 = vmatprep.mubr.bf16.mxu0 %v67
  %203 = vmatmul.mubr.bf16.gmra.mrb[0].mxu0 %v66
  %v204 = vpop.f32.mrb[0].mxu0
  %v205 = vadd.f32 %v55, %v204
  %v206 = vpop.f32.mrb[0].mxu0
  %v207 = vpop.f32.mrb[0].mxu0
  %v208 = vadd.f32 %v55, %v207
  %v209 = vpop.f32.mrb[0].mxu0
  %210 = vmatprep.mubr.bf16.mxu0 %v69
  %211 = vmatmul.mubr.bf16.gmra.mrb[0].mxu0 %v68
  %v212 = vpop.f32.mrb[0].mxu0
  %v213 = vadd.f32 %v55, %v212
  %v214 = vpop.f32.mrb[0].mxu0
  %v215 = vpop.f32.mrb[0].mxu0
  %v216 = vpop.f32.mrb[0].mxu0
  %217 = vdwg.mxu0
  %vm218 = vcmp.ge.f32.partialorder %v205, 0.0
  %vm219 = vcmp.ge.f32.partialorder %v208, 0.0
  %vm220 = vcmp.ge.f32.partialorder %v213, 0.0
  %v221 = vmul.f32 %v205, 0.2
  %v222 = vmul.f32 %v208, 0.2
  %v223 = vmul.f32 %v213, 0.2
  %v224 = vsel %vm218, %v205, %v221
  %v225 = vsel %vm219, %v208, %v222
  %v226 = vsel %vm220, %v213, %v223
  %v227 = vpack.c.bf16 %v225, %v224
  %v228 = vpack.c.bf16 %v226, %v226
  %v231 = vunpack.c.l.b16 %v227
  %v232 = vunpack.c.h.b16 %v227
  %v233 = vunpack.c.l.b16 %v228
  %v234 = vpack.c.b16 %v231, %v231
  %v235 = vpack.c.b16 %v232, %v232
  %v236 = vpack.c.b16 %v233, %v233
  %240 = vst [vmem:[%s3] sm:$0xf] %v234
  %241 = vst [vmem:[%s3 + $0x4] sm:$0xf] %v235
  %242 = vst [vmem:[%s3 + $0x8] sm:$0x1] %v236
  // Predicated region
  $region14: #{no_norm_discriminator_forward.7} parent=0 // pred_check
    _
  $region15: #{no_norm_discriminator_forward.7} parent=0 // pred_check_branch
    %244 = sbr.rel (0) target = $region17
  $region16: #{no_norm_discriminator_forward.7} parent=0 // pred_region
    _
  $region17: #{no_norm_discriminator_forward.7} parent=0 // pred_fallthru
    _
  // Predicated region
  $region18: #{no_norm_discriminator_forward.7} parent=0 // pred_check
    _
  $region19: #{no_norm_discriminator_forward.7} parent=0 // pred_check_branch
    %246 = sbr.rel (0) target = $region21
  $region20: #{no_norm_discriminator_forward.7} parent=0 // pred_region
    _
  $region21: #{no_norm_discriminator_forward.7} parent=0 // pred_fallthru
    _

// kernel: no_norm_discriminator_forward.8
$region0: #{no_norm_discriminator_forward.8}
  #allocation0 [shape = 'u32[]', space=smem, size = 0x4, offset = 0x4, fixed_abs, tag = 'smem constant byte address 0x4 - core index']
  #allocation1 [shape = 'u32[144,128]{1,0:T(1,128)}', space=vmem, size = 0x12000, scoped, tag = 'internal scratch']
  %s0 = inlined_call_operand.vmem [shape: bf16[32,512], index: 0, kind: input, shape index: {}]
  %s1 = inlined_call_operand.vmem [shape: bf16[512,128], index: 1, kind: input, shape index: {}]
  %s2 = inlined_call_operand.vmem [shape: f32[1,128], index: 2, kind: input, shape index: {}]
  %s3 = inlined_call_operand.vmem [shape: bf16[32,128], index: 3, kind: output, shape index: {}]
  %s4 = sld [smem:[#allocation0]]
  $region22: #{no_norm_discriminator_forward.8} parent=0
    _
  %s6 = ssub.s32 1, %s4
  %s7 = scalar_select 0, %s6, %s4
  // Predicated region
  $region2: #{no_norm_discriminator_forward.8} parent=0 // pred_check
    _
  $region3: #{no_norm_discriminator_forward.8} parent=0 // pred_check_branch
    %9 = sbr.rel (0) target = $region5
  $region4: #{no_norm_discriminator_forward.8} parent=0 // pred_region
    _
  $region5: #{no_norm_discriminator_forward.8} parent=0 // pred_fallthru
    _
  // Predicated region
  $region6: #{no_norm_discriminator_forward.8} parent=0 // pred_check
    _
  $region7: #{no_norm_discriminator_forward.8} parent=0 // pred_check_branch
    %11 = sbr.rel (0) target = $region9
  $region8: #{no_norm_discriminator_forward.8} parent=0 // pred_region
    _
  $region9: #{no_norm_discriminator_forward.8} parent=0 // pred_fallthru
    _
  // Predicated region
  $region10: #{no_norm_discriminator_forward.8} parent=0 // pred_check
    _
  $region11: #{no_norm_discriminator_forward.8} parent=0 // pred_check_branch
    %13 = sbr.rel (0) target = $region13
  $region12: #{no_norm_discriminator_forward.8} parent=0 // pred_region
    _
  $region13: #{no_norm_discriminator_forward.8} parent=0 // pred_fallthru
    _
  %v15 = vld [vmem:[%s0] sm:$0xff]
  %v16 = vld [vmem:[%s0 + $0x8] sm:$0xff]
  %v17 = vld [vmem:[%s0 + $0x10] sm:$0xff]
  %v18 = vld [vmem:[%s0 + $0x18] sm:$0xff]
  %v19 = vld [vmem:[%s0 + $0x20] sm:$0xff]
  %v20 = vld [vmem:[%s0 + $0x28] sm:$0xff]
  %v21 = vld [vmem:[%s0 + $0x30] sm:$0xff]
  %v22 = vld [vmem:[%s0 + $0x38] sm:$0xff]
  %v23 = vld [vmem:[%s1] sm:$0xf]
  %v24 = vld [vmem:[%s1 + $0x4] sm:$0xf]
  %v25 = vld [vmem:[%s1 + $0x8] sm:$0xf]
  %v26 = vld [vmem:[%s1 + $0xc] sm:$0xf]
  %v27 = vld [vmem:[%s1 + $0x10] sm:$0xf]
  %v28 = vld [vmem:[%s1 + $0x14] sm:$0xf]
  %v29 = vld [vmem:[%s1 + $0x18] sm:$0xf]
  %v30 = vld [vmem:[%s1 + $0x1c] sm:$0xf]
  %v31 = vld [vmem:[%s1 + $0x20] sm:$0xf]
  %v32 = vld [vmem:[%s1 + $0x24] sm:$0xf]
  %v33 = vld [vmem:[%s1 + $0x28] sm:$0xf]
  %v34 = vld [vmem:[%s1 + $0x2c] sm:$0xf]
  %v35 = vld [vmem:[%s1 + $0x30] sm:$0xf]
  %v36 = vld [vmem:[%s1 + $0x34] sm:$0xf]
  %v37 = vld [vmem:[%s1 + $0x38] sm:$0xf]
  %v38 = vld [vmem:[%s1 + $0x3c] sm:$0xf]
  %v39 = vld [vmem:[%s1 + $0x40] sm:$0xf]
  %v40 = vld [vmem:[%s1 + $0x44] sm:$0xf]
  %v41 = vld [vmem:[%s1 + $0x48] sm:$0xf]
  %v42 = vld [vmem:[%s1 + $0x4c] sm:$0xf]
  %v43 = vld [vmem:[%s1 + $0x50] sm:$0xf]
  %v44 = vld [vmem:[%s1 + $0x54] sm:$0xf]
  %v45 = vld [vmem:[%s1 + $0x58] sm:$0xf]
  %v46 = vld [vmem:[%s1 + $0x5c] sm:$0xf]
  %v47 = vld [vmem:[%s1 + $0x60] sm:$0xf]
  %v48 = vld [vmem:[%s1 + $0x64] sm:$0xf]
  %v49 = vld [vmem:[%s1 + $0x68] sm:$0xf]
  %v50 = vld [vmem:[%s1 + $0x6c] sm:$0xf]
  %v51 = vld [vmem:[%s1 + $0x70] sm:$0xf]
  %v52 = vld [vmem:[%s1 + $0x74] sm:$0xf]
  %v53 = vld [vmem:[%s1 + $0x78] sm:$0xf]
  %v54 = vld [vmem:[%s1 + $0x7c] sm:$0xf]
  %v55 = vld [vmem:[%s1 + $0x80] sm:$0xf]
  %v56 = vld [vmem:[%s1 + $0x84] sm:$0xf]
  %v57 = vld [vmem:[%s1 + $0x88] sm:$0xf]
  %v58 = vld [vmem:[%s1 + $0x8c] sm:$0xf]
  %v59 = vld [vmem:[%s1 + $0x90] sm:$0xf]
  %v60 = vld [vmem:[%s1 + $0x94] sm:$0xf]
  %v61 = vld [vmem:[%s1 + $0x98] sm:$0xf]
  %v62 = vld [vmem:[%s1 + $0x9c] sm:$0xf]
  %v63 = vld [vmem:[%s1 + $0xa0] sm:$0xf]
  %v64 = vld [vmem:[%s1 + $0xa4] sm:$0xf]
  %v65 = vld [vmem:[%s1 + $0xa8] sm:$0xf]
  %v66 = vld [vmem:[%s1 + $0xac] sm:$0xf]
  %v67 = vld [vmem:[%s1 + $0xb0] sm:$0xf]
  %v68 = vld [vmem:[%s1 + $0xb4] sm:$0xf]
  %v69 = vld [vmem:[%s1 + $0xb8] sm:$0xf]
  %v70 = vld [vmem:[%s1 + $0xbc] sm:$0xf]
  %v71 = vld [vmem:[%s1 + $0xc0] sm:$0xf]
  %v72 = vld [vmem:[%s1 + $0xc4] sm:$0xf]
  %v73 = vld [vmem:[%s1 + $0xc8] sm:$0xf]
  %v74 = vld [vmem:[%s1 + $0xcc] sm:$0xf]
  %v75 = vld [vmem:[%s1 + $0xd0] sm:$0xf]
  %v76 = vld [vmem:[%s1 + $0xd4] sm:$0xf]
  %v77 = vld [vmem:[%s1 + $0xd8] sm:$0xf]
  %v78 = vld [vmem:[%s1 + $0xdc] sm:$0xf]
  %v79 = vld [vmem:[%s1 + $0xe0] sm:$0xf]
  %v80 = vld [vmem:[%s1 + $0xe4] sm:$0xf]
  %v81 = vld [vmem:[%s1 + $0xe8] sm:$0xf]
  %v82 = vld [vmem:[%s1 + $0xec] sm:$0xf]
  %v83 = vld [vmem:[%s1 + $0xf0] sm:$0xf]
  %v84 = vld [vmem:[%s1 + $0xf4] sm:$0xf]
  %v85 = vld [vmem:[%s1 + $0xf8] sm:$0xf]
  %v86 = vld [vmem:[%s1 + $0xfc] sm:$0xf]
  %v87 = vld [vmem:[%s2] sm:$0x1]
  %v89 = vlaneseq
  %v90 = vshrl.u32 %v89, 7
  %v91 = vsub.s32 0, %v90
  %v92 = vrot.slane %v87, %v91
  %v102 = vunpack.c.l.b16 %v15
  %v103 = vunpack.c.h.b16 %v15
  %v104 = vunpack.c.l.b16 %v16
  %v105 = vunpack.c.h.b16 %v16
  %v106 = vunpack.c.l.b16 %v17
  %v107 = vunpack.c.h.b16 %v17
  %v108 = vunpack.c.l.b16 %v18
  %v109 = vunpack.c.h.b16 %v18
  %v110 = vunpack.c.l.b16 %v19
  %v111 = vunpack.c.h.b16 %v19
  %v112 = vunpack.c.l.b16 %v20
  %v113 = vunpack.c.h.b16 %v20
  %v114 = vunpack.c.l.b16 %v21
  %v115 = vunpack.c.h.b16 %v21
  %v116 = vunpack.c.l.b16 %v22
  %v117 = vunpack.c.h.b16 %v22
  %v118 = vpack.c.b16 %v106, %v102
  %v119 = vpack.c.b16 %v107, %v103
  %v120 = vpack.c.b16 %v108, %v104
  %v121 = vpack.c.b16 %v109, %v105
  %v122 = vpack.c.b16 %v114, %v110
  %v123 = vpack.c.b16 %v115, %v111
  %v124 = vpack.c.b16 %v116, %v112
  %v125 = vpack.c.b16 %v117, %v113
  %v198 = vunpack.c.l.b16 %v23
  %v199 = vunpack.c.l.b16 %v24
  %v200 = vunpack.c.l.b16 %v25
  %v201 = vunpack.c.l.b16 %v26
  %v202 = vunpack.c.l.b16 %v27
  %v203 = vunpack.c.l.b16 %v28
  %v204 = vunpack.c.l.b16 %v29
  %v205 = vunpack.c.l.b16 %v30
  %v206 = vunpack.c.l.b16 %v31
  %v207 = vunpack.c.l.b16 %v32
  %v208 = vunpack.c.l.b16 %v33
  %v209 = vunpack.c.l.b16 %v34
  %v210 = vunpack.c.l.b16 %v35
  %v211 = vunpack.c.l.b16 %v36
  %v212 = vunpack.c.l.b16 %v37
  %v213 = vunpack.c.l.b16 %v38
  %v214 = vunpack.c.l.b16 %v39
  %v215 = vunpack.c.l.b16 %v40
  %v216 = vunpack.c.l.b16 %v41
  %v217 = vunpack.c.l.b16 %v42
  %v218 = vunpack.c.l.b16 %v43
  %v219 = vunpack.c.l.b16 %v44
  %v220 = vunpack.c.l.b16 %v45
  %v221 = vunpack.c.l.b16 %v46
  %v222 = vunpack.c.l.b16 %v47
  %v223 = vunpack.c.l.b16 %v48
  %v224 = vunpack.c.l.b16 %v49
  %v225 = vunpack.c.l.b16 %v50
  %v226 = vunpack.c.l.b16 %v51
  %v227 = vunpack.c.l.b16 %v52
  %v228 = vunpack.c.l.b16 %v53
  %v229 = vunpack.c.l.b16 %v54
  %v230 = vunpack.c.l.b16 %v55
  %v231 = vunpack.c.l.b16 %v56
  %v232 = vunpack.c.l.b16 %v57
  %v233 = vunpack.c.l.b16 %v58
  %v234 = vunpack.c.l.b16 %v59
  %v235 = vunpack.c.l.b16 %v60
  %v236 = vunpack.c.l.b16 %v61
  %v237 = vunpack.c.l.b16 %v62
  %v238 = vunpack.c.l.b16 %v63
  %v239 = vunpack.c.l.b16 %v64
  %v240 = vunpack.c.l.b16 %v65
  %v241 = vunpack.c.l.b16 %v66
  %v242 = vunpack.c.l.b16 %v67
  %v243 = vunpack.c.l.b16 %v68
  %v244 = vunpack.c.l.b16 %v69
  %v245 = vunpack.c.l.b16 %v70
  %v246 = vunpack.c.l.b16 %v71
  %v247 = vunpack.c.l.b16 %v72
  %v248 = vunpack.c.l.b16 %v73
  %v249 = vunpack.c.l.b16 %v74
  %v250 = vunpack.c.l.b16 %v75
  %v251 = vunpack.c.l.b16 %v76
  %v252 = vunpack.c.l.b16 %v77
  %v253 = vunpack.c.l.b16 %v78
  %v254 = vunpack.c.l.b16 %v79
  %v255 = vunpack.c.l.b16 %v80
  %v256 = vunpack.c.l.b16 %v81
  %v257 = vunpack.c.l.b16 %v82
  %v258 = vunpack.c.l.b16 %v83
  %v259 = vunpack.c.l.b16 %v84
  %v260 = vunpack.c.l.b16 %v85
  %v261 = vunpack.c.l.b16 %v86
  %v262 = vpack.c.b16 %v199, %v198
  %v263 = vpack.c.b16 %v201, %v200
  %v264 = vpack.c.b16 %v203, %v202
  %v265 = vpack.c.b16 %v205, %v204
  %v266 = vpack.c.b16 %v207, %v206
  %v267 = vpack.c.b16 %v209, %v208
  %v268 = vpack.c.b16 %v211, %v210
  %v269 = vpack.c.b16 %v213, %v212
  %v270 = vpack.c.b16 %v215, %v214
  %v271 = vpack.c.b16 %v217, %v216
  %v272 = vpack.c.b16 %v219, %v218
  %v273 = vpack.c.b16 %v221, %v220
  %v274 = vpack.c.b16 %v223, %v222
  %v275 = vpack.c.b16 %v225, %v224
  %v276 = vpack.c.b16 %v227, %v226
  %v277 = vpack.c.b16 %v229, %v228
  %v278 = vpack.c.b16 %v231, %v230
  %v279 = vpack.c.b16 %v233, %v232
  %v280 = vpack.c.b16 %v235, %v234
  %v281 = vpack.c.b16 %v237, %v236
  %v282 = vpack.c.b16 %v239, %v238
  %v283 = vpack.c.b16 %v241, %v240
  %v284 = vpack.c.b16 %v243, %v242
  %v285 = vpack.c.b16 %v245, %v244
  %v286 = vpack.c.b16 %v247, %v246
  %v287 = vpack.c.b16 %v249, %v248
  %v288 = vpack.c.b16 %v251, %v250
  %v289 = vpack.c.b16 %v253, %v252
  %v290 = vpack.c.b16 %v255, %v254
  %v291 = vpack.c.b16 %v257, %v256
  %v292 = vpack.c.b16 %v259, %v258
  %v293 = vpack.c.b16 %v261, %v260
  %326 = vmatprep.subr.bf16.mxu0 0
  %327 = vmatpush1.bf16.msra.mxu0 %v262
  %328 = vmatprep.subr.bf16.mxu0 0
  %329 = vmatpush1.bf16.msra.mxu0 %v263
  %330 = vmatprep.subr.bf16.mxu0 0
  %331 = vmatpush1.bf16.msra.mxu0 %v264
  %332 = vmatprep.subr.bf16.mxu0 0
  %333 = vmatpush1.bf16.msra.mxu0 %v265
  %334 = vmatprep.subr.bf16.mxu0 0
  %335 = vmatpush1.bf16.msra.mxu0 %v266
  %336 = vmatprep.subr.bf16.mxu0 0
  %337 = vmatpush1.bf16.msra.mxu0 %v267
  %338 = vmatprep.subr.bf16.mxu0 0
  %339 = vmatpush1.bf16.msra.mxu0 %v268
  %340 = vmatprep.subr.bf16.mxu0 0
  %341 = vmatpush1.bf16.msra.mxu0 %v269
  %342 = vmatprep.subr.bf16.mxu0 0
  %343 = vmatpush1.bf16.msra.mxu0 %v270
  %344 = vmatprep.subr.bf16.mxu0 0
  %345 = vmatpush1.bf16.msra.mxu0 %v271
  %346 = vmatprep.subr.bf16.mxu0 0
  %347 = vmatpush1.bf16.msra.mxu0 %v272
  %348 = vmatprep.subr.bf16.mxu0 0
  %349 = vmatpush1.bf16.msra.mxu0 %v273
  %350 = vmatprep.subr.bf16.mxu0 0
  %351 = vmatpush1.bf16.msra.mxu0 %v274
  %352 = vmatprep.subr.bf16.mxu0 0
  %353 = vmatpush1.bf16.msra.mxu0 %v275
  %354 = vmatprep.subr.bf16.mxu0 0
  %355 = vmatpush1.bf16.msra.mxu0 %v276
  %356 = vmatprep.subr.bf16.mxu0 0
  %357 = vmatpush1.bf16.msra.mxu0 %v277
  %358 = vmatprep.mubr.bf16.mxu0 %v119
  %359 = vmatmul.mubr.bf16.gmra.mrb[0].mxu0 %v118
  %v360 = vpop.f32.mrb[0].mxu0
  %v361 = vadd.f32 %v92, %v360
  %v362 = vpop.f32.mrb[0].mxu0
  %v363 = vpop.f32.mrb[0].mxu0
  %v364 = vadd.f32 %v92, %v363
  %v365 = vpop.f32.mrb[0].mxu0
  %366 = vmatprep.mubr.bf16.mxu0 %v123
  %367 = vmatmul.mubr.bf16.gmra.mrb[0].mxu0 %v122
  %v368 = vpop.f32.mrb[0].mxu0
  %v369 = vadd.f32 %v92, %v368
  %v370 = vpop.f32.mrb[0].mxu0
  %v371 = vpop.f32.mrb[0].mxu0
  %v372 = vadd.f32 %v92, %v371
  %v373 = vpop.f32.mrb[0].mxu0
  %374 = vdwg.mxu0
  %375 = vmatprep.subr.bf16.mxu0 0
  %376 = vmatpush1.bf16.msra.mxu0 %v278
  %377 = vmatprep.subr.bf16.mxu0 0
  %378 = vmatpush1.bf16.msra.mxu0 %v279
  %379 = vmatprep.subr.bf16.mxu0 0
  %380 = vmatpush1.bf16.msra.mxu0 %v280
  %381 = vmatprep.subr.bf16.mxu0 0
  %382 = vmatpush1.bf16.msra.mxu0 %v281
  %383 = vmatprep.subr.bf16.mxu0 0
  %384 = vmatpush1.bf16.msra.mxu0 %v282
  %385 = vmatprep.subr.bf16.mxu0 0
  %386 = vmatpush1.bf16.msra.mxu0 %v283
  %387 = vmatprep.subr.bf16.mxu0 0
  %388 = vmatpush1.bf16.msra.mxu0 %v284
  %389 = vmatprep.subr.bf16.mxu0 0
  %390 = vmatpush1.bf16.msra.mxu0 %v285
  %391 = vmatprep.subr.bf16.mxu0 0
  %392 = vmatpush1.bf16.msra.mxu0 %v286
  %393 = vmatprep.subr.bf16.mxu0 0
  %394 = vmatpush1.bf16.msra.mxu0 %v287
  %395 = vmatprep.subr.bf16.mxu0 0
  %396 = vmatpush1.bf16.msra.mxu0 %v288
  %397 = vmatprep.subr.bf16.mxu0 0
  %398 = vmatpush1.bf16.msra.mxu0 %v289
  %399 = vmatprep.subr.bf16.mxu0 0
  %400 = vmatpush1.bf16.msra.mxu0 %v290
  %401 = vmatprep.subr.bf16.mxu0 0
  %402 = vmatpush1.bf16.msra.mxu0 %v291
  %403 = vmatprep.subr.bf16.mxu0 0
  %404 = vmatpush1.bf16.msra.mxu0 %v292
  %405 = vmatprep.subr.bf16.mxu0 0
  %406 = vmatpush1.bf16.msra.mxu0 %v293
  %407 = vmatprep.mubr.bf16.mxu0 %v121
  %408 = vmatmul.mubr.bf16.gmra.mrb[0].mxu0 %v120
  %v409 = vpop.f32.mrb[0].mxu0
  %v410 = vadd.f32 %v361, %v409
  %v411 = vpop.f32.mrb[0].mxu0
  %v412 = vpop.f32.mrb[0].mxu0
  %v413 = vadd.f32 %v364, %v412
  %v414 = vpop.f32.mrb[0].mxu0
  %415 = vmatprep.mubr.bf16.mxu0 %v125
  %416 = vmatmul.mubr.bf16.gmra.mrb[0].mxu0 %v124
  %v417 = vpop.f32.mrb[0].mxu0
  %v418 = vadd.f32 %v369, %v417
  %v419 = vpop.f32.mrb[0].mxu0
  %v420 = vpop.f32.mrb[0].mxu0
  %v421 = vadd.f32 %v372, %v420
  %v422 = vpop.f32.mrb[0].mxu0
  %423 = vdwg.mxu0
  %vm424 = vcmp.ge.f32.partialorder %v410, 0.0
  %vm425 = vcmp.ge.f32.partialorder %v413, 0.0
  %vm426 = vcmp.ge.f32.partialorder %v418, 0.0
  %vm427 = vcmp.ge.f32.partialorder %v421, 0.0
  %v428 = vmul.f32 %v410, 0.2
  %v429 = vmul.f32 %v413, 0.2
  %v430 = vmul.f32 %v418, 0.2
  %v431 = vmul.f32 %v421, 0.2
  %v432 = vsel %vm424, %v410, %v428
  %v433 = vsel %vm425, %v413, %v429
  %v434 = vsel %vm426, %v418, %v430
  %v435 = vsel %vm427, %v421, %v431
  %v436 = vpack.c.bf16 %v433, %v432
  %v437 = vpack.c.bf16 %v435, %v434
  %v440 = vunpack.c.l.b16 %v436
  %v441 = vunpack.c.h.b16 %v436
  %v442 = vunpack.c.l.b16 %v437
  %v443 = vunpack.c.h.b16 %v437
  %v444 = vpack.c.b16 %v440, %v440
  %v445 = vpack.c.b16 %v441, %v441
  %v446 = vpack.c.b16 %v442, %v442
  %v447 = vpack.c.b16 %v443, %v443
  %452 = vst [vmem:[%s3] sm:$0xf] %v444
  %453 = vst [vmem:[%s3 + $0x4] sm:$0xf] %v445
  %454 = vst [vmem:[%s3 + $0x8] sm:$0xf] %v446
  %455 = vst [vmem:[%s3 + $0xc] sm:$0xf] %v447
  // Predicated region
  $region14: #{no_norm_discriminator_forward.8} parent=0 // pred_check
    _
  $region15: #{no_norm_discriminator_forward.8} parent=0 // pred_check_branch
    %457 = sbr.rel (0) target = $region17
  $region16: #{no_norm_discriminator_forward.8} parent=0 // pred_region
    _
  $region17: #{no_norm_discriminator_forward.8} parent=0 // pred_fallthru
    _
  // Predicated region
  $region18: #{no_norm_discriminator_forward.8} parent=0 // pred_check
    _
  $region19: #{no_norm_discriminator_forward.8} parent=0 // pred_check_branch
    %459 = sbr.rel (0) target = $region21
  $region20: #{no_norm_discriminator_forward.8} parent=0 // pred_region
    _
  $region21: #{no_norm_discriminator_forward.8} parent=0 // pred_fallthru
    _

// kernel: no_norm_discriminator_forward.9
$region0: #{no_norm_discriminator_forward.9}
  #allocation0 [shape = 'u32[]', space=smem, size = 0x4, offset = 0x4, fixed_abs, tag = 'smem constant byte address 0x4 - core index']
  #allocation1 [shape = 'u32[144,128]{1,0:T(1,128)}', space=vmem, size = 0x12000, scoped, tag = 'internal scratch']
  %s0 = inlined_call_operand.vmem [shape: bf16[50,1024], index: 0, kind: input, shape index: {}]
  %s1 = inlined_call_operand.vmem [shape: bf16[1024,128], index: 1, kind: input, shape index: {}]
  %s2 = inlined_call_operand.vmem [shape: f32[1,128], index: 2, kind: input, shape index: {}]
  %s3 = inlined_call_operand.vmem [shape: f32[50,128], index: 3, kind: output, shape index: {}]
  %s4 = sld [smem:[#allocation0]]
  $region22: #{no_norm_discriminator_forward.9} parent=0
    _
  %s6 = ssub.s32 1, %s4
  %s7 = scalar_select 0, %s6, %s4
  // Predicated region
  $region2: #{no_norm_discriminator_forward.9} parent=0 // pred_check
    _
  $region3: #{no_norm_discriminator_forward.9} parent=0 // pred_check_branch
    %9 = sbr.rel (0) target = $region5
  $region4: #{no_norm_discriminator_forward.9} parent=0 // pred_region
    _
  $region5: #{no_norm_discriminator_forward.9} parent=0 // pred_fallthru
    _
  // Predicated region
  $region6: #{no_norm_discriminator_forward.9} parent=0 // pred_check
    _
  $region7: #{no_norm_discriminator_forward.9} parent=0 // pred_check_branch
    %11 = sbr.rel (0) target = $region9
  $region8: #{no_norm_discriminator_forward.9} parent=0 // pred_region
    _
  $region9: #{no_norm_discriminator_forward.9} parent=0 // pred_fallthru
    _
  // Predicated region
  $region10: #{no_norm_discriminator_forward.9} parent=0 // pred_check
    _
  $region11: #{no_norm_discriminator_forward.9} parent=0 // pred_check_branch
    %13 = sbr.rel (0) target = $region13
  $region12: #{no_norm_discriminator_forward.9} parent=0 // pred_region
    _
  $region13: #{no_norm_discriminator_forward.9} parent=0 // pred_fallthru
    _
  %v15 = vld [vmem:[%s0] sm:$0xff]
  %v16 = vld [vmem:[%s0 + $0x8] sm:$0xff]
  %v17 = vld [vmem:[%s0 + $0x10] sm:$0xff]
  %v18 = vld [vmem:[%s0 + $0x18] sm:$0xff]
  %v19 = vld [vmem:[%s0 + $0x20] sm:$0xff]
  %v20 = vld [vmem:[%s0 + $0x28] sm:$0xff]
  %v21 = vld [vmem:[%s0 + $0x30] sm:$0xff]
  %v22 = vld [vmem:[%s0 + $0x38] sm:$0xff]
  %v23 = vld [vmem:[%s0 + $0x40] sm:$0xff]
  %v24 = vld [vmem:[%s0 + $0x48] sm:$0xff]
  %v25 = vld [vmem:[%s0 + $0x50] sm:$0xff]
  %v26 = vld [vmem:[%s0 + $0x58] sm:$0xff]
  %v27 = vld [vmem:[%s0 + $0x60] sm:$0xff]
  %v28 = vld [vmem:[%s0 + $0x68] sm:$0xff]
  %v29 = vld [vmem:[%s0 + $0x70] sm:$0xff]
  %v30 = vld [vmem:[%s0 + $0x78] sm:$0xff]
  %v31 = vld [vmem:[%s0 + $0x80] sm:$0xff]
  %v32 = vld [vmem:[%s0 + $0x88] sm:$0xff]
  %v33 = vld [vmem:[%s0 + $0x90] sm:$0xff]
  %v34 = vld [vmem:[%s0 + $0x98] sm:$0xff]
  %v35 = vld [vmem:[%s0 + $0xa0] sm:$0xff]
  %v36 = vld [vmem:[%s0 + $0xa8] sm:$0xff]
  %v37 = vld [vmem:[%s0 + $0xb0] sm:$0xff]
  %v38 = vld [vmem:[%s0 + $0xb8] sm:$0xff]
  %v39 = vld [vmem:[%s0 + $0xc0] sm:$0x11]
  %v40 = vld [vmem:[%s0 + $0xc8] sm:$0x11]
  %v41 = vld [vmem:[%s0 + $0xd0] sm:$0x11]
  %v42 = vld [vmem:[%s0 + $0xd8] sm:$0x11]
  %v43 = vld [vmem:[%s1] sm:$0xf]
  %v44 = vld [vmem:[%s1 + $0x4] sm:$0xf]
  %v45 = vld [vmem:[%s1 + $0x8] sm:$0xf]
  %v46 = vld [vmem:[%s1 + $0xc] sm:$0xf]
  %v47 = vld [vmem:[%s1 + $0x10] sm:$0xf]
  %v48 = vld [vmem:[%s1 + $0x14] sm:$0xf]
  %v49 = vld [vmem:[%s1 + $0x18] sm:$0xf]
  %v50 = vld [vmem:[%s1 + $0x1c] sm:$0xf]
  %v51 = vld [vmem:[%s1 + $0x20] sm:$0xf]
  %v52 = vld [vmem:[%s1 + $0x24] sm:$0xf]
  %v53 = vld [vmem:[%s1 + $0x28] sm:$0xf]
  %v54 = vld [vmem:[%s1 + $0x2c] sm:$0xf]
  %v55 = vld [vmem:[%s1 + $0x30] sm:$0xf]
  %v56 = vld [vmem:[%s1 + $0x34] sm:$0xf]
  %v57 = vld [vmem:[%s1 + $0x38] sm:$0xf]
  %v58 = vld [vmem:[%s1 + $0x3c] sm:$0xf]
  %v59 = vld [vmem:[%s1 + $0x40] sm:$0xf]
  %v60 = vld [vmem:[%s1 + $0x44] sm:$0xf]
  %v61 = vld [vmem:[%s1 + $0x48] sm:$0xf]
  %v62 = vld [vmem:[%s1 + $0x4c] sm:$0xf]
  %v63 = vld [vmem:[%s1 + $0x50] sm:$0xf]
  %v64 = vld [vmem:[%s1 + $0x54] sm:$0xf]
  %v65 = vld [vmem:[%s1 + $0x58] sm:$0xf]
  %v66 = vld [vmem:[%s1 + $0x5c] sm:$0xf]
  %v67 = vld [vmem:[%s1 + $0x60] sm:$0xf]
  %v68 = vld [vmem:[%s1 + $0x64] sm:$0xf]
  %v69 = vld [vmem:[%s1 + $0x68] sm:$0xf]
  %v70 = vld [vmem:[%s1 + $0x6c] sm:$0xf]
  %v71 = vld [vmem:[%s1 + $0x70] sm:$0xf]
  %v72 = vld [vmem:[%s1 + $0x74] sm:$0xf]
  %v73 = vld [vmem:[%s1 + $0x78] sm:$0xf]
  %v74 = vld [vmem:[%s1 + $0x7c] sm:$0xf]
  %v75 = vld [vmem:[%s1 + $0x80] sm:$0xf]
  %v76 = vld [vmem:[%s1 + $0x84] sm:$0xf]
  %v77 = vld [vmem:[%s1 + $0x88] sm:$0xf]
  %v78 = vld [vmem:[%s1 + $0x8c] sm:$0xf]
  %v79 = vld [vmem:[%s1 + $0x90] sm:$0xf]
  %v80 = vld [vmem:[%s1 + $0x94] sm:$0xf]
  %v81 = vld [vmem:[%s1 + $0x98] sm:$0xf]
  %v82 = vld [vmem:[%s1 + $0x9c] sm:$0xf]
  %v83 = vld [vmem:[%s1 + $0xa0] sm:$0xf]
  %v84 = vld [vmem:[%s1 + $0xa4] sm:$0xf]
  %v85 = vld [vmem:[%s1 + $0xa8] sm:$0xf]
  %v86 = vld [vmem:[%s1 + $0xac] sm:$0xf]
  %v87 = vld [vmem:[%s1 + $0xb0] sm:$0xf]
  %v88 = vld [vmem:[%s1 + $0xb4] sm:$0xf]
  %v89 = vld [vmem:[%s1 + $0xb8] sm:$0xf]
  %v90 = vld [vmem:[%s1 + $0xbc] sm:$0xf]
  %v91 = vld [vmem:[%s1 + $0xc0] sm:$0xf]
  %v92 = vld [vmem:[%s1 + $0xc4] sm:$0xf]
  %v93 = vld [vmem:[%s1 + $0xc8] sm:$0xf]
  %v94 = vld [vmem:[%s1 + $0xcc] sm:$0xf]
  %v95 = vld [vmem:[%s1 + $0xd0] sm:$0xf]
  %v96 = vld [vmem:[%s1 + $0xd4] sm:$0xf]
  %v97 = vld [vmem:[%s1 + $0xd8] sm:$0xf]
  %v98 = vld [vmem:[%s1 + $0xdc] sm:$0xf]
  %v99 = vld [vmem:[%s1 + $0xe0] sm:$0xf]
  %v100 = vld [vmem:[%s1 + $0xe4] sm:$0xf]
  %v101 = vld [vmem:[%s1 + $0xe8] sm:$0xf]
  %v102 = vld [vmem:[%s1 + $0xec] sm:$0xf]
  %v103 = vld [vmem:[%s1 + $0xf0] sm:$0xf]
  %v104 = vld [vmem:[%s1 + $0xf4] sm:$0xf]
  %v105 = vld [vmem:[%s1 + $0xf8] sm:$0xf]
  %v106 = vld [vmem:[%s1 + $0xfc] sm:$0xf]
  %v107 = vld [vmem:[%s1 + $0x100] sm:$0xf]
  %v108 = vld [vmem:[%s1 + $0x104] sm:$0xf]
  %v109 = vld [vmem:[%s1 + $0x108] sm:$0xf]
  %v110 = vld [vmem:[%s1 + $0x10c] sm:$0xf]
  %v111 = vld [vmem:[%s1 + $0x110] sm:$0xf]
  %v112 = vld [vmem:[%s1 + $0x114] sm:$0xf]
  %v113 = vld [vmem:[%s1 + $0x118] sm:$0xf]
  %v114 = vld [vmem:[%s1 + $0x11c] sm:$0xf]
  %v115 = vld [vmem:[%s1 + $0x120] sm:$0xf]
  %v116 = vld [vmem:[%s1 + $0x124] sm:$0xf]
  %v117 = vld [vmem:[%s1 + $0x128] sm:$0xf]
  %v118 = vld [vmem:[%s1 + $0x12c] sm:$0xf]
  %v119 = vld [vmem:[%s1 + $0x130] sm:$0xf]
  %v120 = vld [vmem:[%s1 + $0x134] sm:$0xf]
  %v121 = vld [vmem:[%s1 + $0x138] sm:$0xf]
  %v122 = vld [vmem:[%s1 + $0x13c] sm:$0xf]
  %v123 = vld [vmem:[%s1 + $0x140] sm:$0xf]
  %v124 = vld [vmem:[%s1 + $0x144] sm:$0xf]
  %v125 = vld [vmem:[%s1 + $0x148] sm:$0xf]
  %v126 = vld [vmem:[%s1 + $0x14c] sm:$0xf]
  %v127 = vld [vmem:[%s1 + $0x150] sm:$0xf]
  %v128 = vld [vmem:[%s1 + $0x154] sm:$0xf]
  %v129 = vld [vmem:[%s1 + $0x158] sm:$0xf]
  %v130 = vld [vmem:[%s1 + $0x15c] sm:$0xf]
  %v131 = vld [vmem:[%s1 + $0x160] sm:$0xf]
  %v132 = vld [vmem:[%s1 + $0x164] sm:$0xf]
  %v133 = vld [vmem:[%s1 + $0x168] sm:$0xf]
  %v134 = vld [vmem:[%s1 + $0x16c] sm:$0xf]
  %v135 = vld [vmem:[%s1 + $0x170] sm:$0xf]
  %v136 = vld [vmem:[%s1 + $0x174] sm:$0xf]
  %v137 = vld [vmem:[%s1 + $0x178] sm:$0xf]
  %v138 = vld [vmem:[%s1 + $0x17c] sm:$0xf]
  %v139 = vld [vmem:[%s1 + $0x180] sm:$0xf]
  %v140 = vld [vmem:[%s1 + $0x184] sm:$0xf]
  %v141 = vld [vmem:[%s1 + $0x188] sm:$0xf]
  %v142 = vld [vmem:[%s1 + $0x18c] sm:$0xf]
  %v143 = vld [vmem:[%s1 + $0x190] sm:$0xf]
  %v144 = vld [vmem:[%s1 + $0x194] sm:$0xf]
  %v145 = vld [vmem:[%s1 + $0x198] sm:$0xf]
  %v146 = vld [vmem:[%s1 + $0x19c] sm:$0xf]
  %v147 = vld [vmem:[%s1 + $0x1a0] sm:$0xf]
  %v148 = vld [vmem:[%s1 + $0x1a4] sm:$0xf]
  %v149 = vld [vmem:[%s1 + $0x1a8] sm:$0xf]
  %v150 = vld [vmem:[%s1 + $0x1ac] sm:$0xf]
  %v151 = vld [vmem:[%s1 + $0x1b0] sm:$0xf]
  %v152 = vld [vmem:[%s1 + $0x1b4] sm:$0xf]
  %v153 = vld [vmem:[%s1 + $0x1b8] sm:$0xf]
  %v154 = vld [vmem:[%s1 + $0x1bc] sm:$0xf]
  %v155 = vld [vmem:[%s1 + $0x1c0] sm:$0xf]
  %v156 = vld [vmem:[%s1 + $0x1c4] sm:$0xf]
  %v157 = vld [vmem:[%s1 + $0x1c8] sm:$0xf]
  %v158 = vld [vmem:[%s1 + $0x1cc] sm:$0xf]
  %v159 = vld [vmem:[%s1 + $0x1d0] sm:$0xf]
  %v160 = vld [vmem:[%s1 + $0x1d4] sm:$0xf]
  %v161 = vld [vmem:[%s1 + $0x1d8] sm:$0xf]
  %v162 = vld [vmem:[%s1 + $0x1dc] sm:$0xf]
  %v163 = vld [vmem:[%s1 + $0x1e0] sm:$0xf]
  %v164 = vld [vmem:[%s1 + $0x1e4] sm:$0xf]
  %v165 = vld [vmem:[%s1 + $0x1e8] sm:$0xf]
  %v166 = vld [vmem:[%s1 + $0x1ec] sm:$0xf]
  %v167 = vld [vmem:[%s1 + $0x1f0] sm:$0xf]
  %v168 = vld [vmem:[%s1 + $0x1f4] sm:$0xf]
  %v169 = vld [vmem:[%s1 + $0x1f8] sm:$0xf]
  %v170 = vld [vmem:[%s1 + $0x1fc] sm:$0xf]
  %v171 = vld [vmem:[%s2] sm:$0x1]
  %v173 = vlaneseq
  %v174 = vshrl.u32 %v173, 7
  %v175 = vsub.s32 0, %v174
  %v176 = vrot.slane %v171, %v175
  %v206 = vunpack.c.l.b16 %v15
  %v207 = vunpack.c.h.b16 %v15
  %v208 = vunpack.c.l.b16 %v16
  %v209 = vunpack.c.h.b16 %v16
  %v210 = vunpack.c.l.b16 %v17
  %v211 = vunpack.c.h.b16 %v17
  %v212 = vunpack.c.l.b16 %v18
  %v213 = vunpack.c.h.b16 %v18
  %v214 = vunpack.c.l.b16 %v19
  %v215 = vunpack.c.h.b16 %v19
  %v216 = vunpack.c.l.b16 %v20
  %v217 = vunpack.c.h.b16 %v20
  %v218 = vunpack.c.l.b16 %v21
  %v219 = vunpack.c.h.b16 %v21
  %v220 = vunpack.c.l.b16 %v22
  %v221 = vunpack.c.h.b16 %v22
  %v222 = vunpack.c.l.b16 %v23
  %v223 = vunpack.c.h.b16 %v23
  %v224 = vunpack.c.l.b16 %v24
  %v225 = vunpack.c.h.b16 %v24
  %v226 = vunpack.c.l.b16 %v25
  %v227 = vunpack.c.h.b16 %v25
  %v228 = vunpack.c.l.b16 %v26
  %v229 = vunpack.c.h.b16 %v26
  %v230 = vunpack.c.l.b16 %v27
  %v231 = vunpack.c.h.b16 %v27
  %v232 = vunpack.c.l.b16 %v28
  %v233 = vunpack.c.h.b16 %v28
  %v234 = vunpack.c.l.b16 %v29
  %v235 = vunpack.c.h.b16 %v29
  %v236 = vunpack.c.l.b16 %v30
  %v237 = vunpack.c.h.b16 %v30
  %v238 = vunpack.c.l.b16 %v31
  %v239 = vunpack.c.h.b16 %v31
  %v240 = vunpack.c.l.b16 %v32
  %v241 = vunpack.c.h.b16 %v32
  %v242 = vunpack.c.l.b16 %v33
  %v243 = vunpack.c.h.b16 %v33
  %v244 = vunpack.c.l.b16 %v34
  %v245 = vunpack.c.h.b16 %v34
  %v246 = vunpack.c.l.b16 %v35
  %v247 = vunpack.c.h.b16 %v35
  %v248 = vunpack.c.l.b16 %v36
  %v249 = vunpack.c.h.b16 %v36
  %v250 = vunpack.c.l.b16 %v37
  %v251 = vunpack.c.h.b16 %v37
  %v252 = vunpack.c.l.b16 %v38
  %v253 = vunpack.c.h.b16 %v38
  %v254 = vunpack.c.l.b16 %v39
  %v255 = vunpack.c.h.b16 %v39
  %v256 = vunpack.c.l.b16 %v40
  %v257 = vunpack.c.h.b16 %v40
  %v258 = vunpack.c.l.b16 %v41
  %v259 = vunpack.c.h.b16 %v41
  %v260 = vunpack.c.l.b16 %v42
  %v261 = vunpack.c.h.b16 %v42
  %v262 = vpack.c.b16 %v214, %v206
  %v263 = vpack.c.b16 %v215, %v207
  %v264 = vpack.c.b16 %v216, %v208
  %v265 = vpack.c.b16 %v217, %v209
  %v266 = vpack.c.b16 %v218, %v210
  %v267 = vpack.c.b16 %v219, %v211
  %v268 = vpack.c.b16 %v220, %v212
  %v269 = vpack.c.b16 %v221, %v213
  %v270 = vpack.c.b16 %v230, %v222
  %v271 = vpack.c.b16 %v231, %v223
  %v272 = vpack.c.b16 %v232, %v224
  %v273 = vpack.c.b16 %v233, %v225
  %v274 = vpack.c.b16 %v234, %v226
  %v275 = vpack.c.b16 %v235, %v227
  %v276 = vpack.c.b16 %v236, %v228
  %v277 = vpack.c.b16 %v237, %v229
  %v278 = vpack.c.b16 %v246, %v238
  %v279 = vpack.c.b16 %v247, %v239
  %v280 = vpack.c.b16 %v248, %v240
  %v281 = vpack.c.b16 %v249, %v241
  %v282 = vpack.c.b16 %v250, %v242
  %v283 = vpack.c.b16 %v251, %v243
  %v284 = vpack.c.b16 %v252, %v244
  %v285 = vpack.c.b16 %v253, %v245
  %v286 = vpack.c.b16 %v254, %v254
  %v287 = vpack.c.b16 %v255, %v255
  %v288 = vpack.c.b16 %v256, %v256
  %v289 = vpack.c.b16 %v257, %v257
  %v290 = vpack.c.b16 %v258, %v258
  %v291 = vpack.c.b16 %v259, %v259
  %v292 = vpack.c.b16 %v260, %v260
  %v293 = vpack.c.b16 %v261, %v261
  %v454 = vunpack.c.l.b16 %v43
  %v455 = vunpack.c.l.b16 %v44
  %v456 = vunpack.c.l.b16 %v45
  %v457 = vunpack.c.l.b16 %v46
  %v458 = vunpack.c.l.b16 %v47
  %v459 = vunpack.c.l.b16 %v48
  %v460 = vunpack.c.l.b16 %v49
  %v461 = vunpack.c.l.b16 %v50
  %v462 = vunpack.c.l.b16 %v51
  %v463 = vunpack.c.l.b16 %v52
  %v464 = vunpack.c.l.b16 %v53
  %v465 = vunpack.c.l.b16 %v54
  %v466 = vunpack.c.l.b16 %v55
  %v467 = vunpack.c.l.b16 %v56
  %v468 = vunpack.c.l.b16 %v57
  %v469 = vunpack.c.l.b16 %v58
  %v470 = vunpack.c.l.b16 %v59
  %v471 = vunpack.c.l.b16 %v60
  %v472 = vunpack.c.l.b16 %v61
  %v473 = vunpack.c.l.b16 %v62
  %v474 = vunpack.c.l.b16 %v63
  %v475 = vunpack.c.l.b16 %v64
  %v476 = vunpack.c.l.b16 %v65
  %v477 = vunpack.c.l.b16 %v66
  %v478 = vunpack.c.l.b16 %v67
  %v479 = vunpack.c.l.b16 %v68
  %v480 = vunpack.c.l.b16 %v69
  %v481 = vunpack.c.l.b16 %v70
  %v482 = vunpack.c.l.b16 %v71
  %v483 = vunpack.c.l.b16 %v72
  %v484 = vunpack.c.l.b16 %v73
  %v485 = vunpack.c.l.b16 %v74
  %v486 = vunpack.c.l.b16 %v75
  %v487 = vunpack.c.l.b16 %v76
  %v488 = vunpack.c.l.b16 %v77
  %v489 = vunpack.c.l.b16 %v78
  %v490 = vunpack.c.l.b16 %v79
  %v491 = vunpack.c.l.b16 %v80
  %v492 = vunpack.c.l.b16 %v81
  %v493 = vunpack.c.l.b16 %v82
  %v494 = vunpack.c.l.b16 %v83
  %v495 = vunpack.c.l.b16 %v84
  %v496 = vunpack.c.l.b16 %v85
  %v497 = vunpack.c.l.b16 %v86
  %v498 = vunpack.c.l.b16 %v87
  %v499 = vunpack.c.l.b16 %v88
  %v500 = vunpack.c.l.b16 %v89
  %v501 = vunpack.c.l.b16 %v90
  %v502 = vunpack.c.l.b16 %v91
  %v503 = vunpack.c.l.b16 %v92
  %v504 = vunpack.c.l.b16 %v93
  %v505 = vunpack.c.l.b16 %v94
  %v506 = vunpack.c.l.b16 %v95
  %v507 = vunpack.c.l.b16 %v96
  %v508 = vunpack.c.l.b16 %v97
  %v509 = vunpack.c.l.b16 %v98
  %v510 = vunpack.c.l.b16 %v99
  %v511 = vunpack.c.l.b16 %v100
  %v512 = vunpack.c.l.b16 %v101
  %v513 = vunpack.c.l.b16 %v102
  %v514 = vunpack.c.l.b16 %v103
  %v515 = vunpack.c.l.b16 %v104
  %v516 = vunpack.c.l.b16 %v105
  %v517 = vunpack.c.l.b16 %v106
  %v518 = vunpack.c.l.b16 %v107
  %v519 = vunpack.c.l.b16 %v108
  %v520 = vunpack.c.l.b16 %v109
  %v521 = vunpack.c.l.b16 %v110
  %v522 = vunpack.c.l.b16 %v111
  %v523 = vunpack.c.l.b16 %v112
  %v524 = vunpack.c.l.b16 %v113
  %v525 = vunpack.c.l.b16 %v114
  %v526 = vunpack.c.l.b16 %v115
  %v527 = vunpack.c.l.b16 %v116
  %v528 = vunpack.c.l.b16 %v117
  %v529 = vunpack.c.l.b16 %v118
  %v530 = vunpack.c.l.b16 %v119
  %v531 = vunpack.c.l.b16 %v120
  %v532 = vunpack.c.l.b16 %v121
  %v533 = vunpack.c.l.b16 %v122
  %v534 = vunpack.c.l.b16 %v123
  %v535 = vunpack.c.l.b16 %v124
  %v536 = vunpack.c.l.b16 %v125
  %v537 = vunpack.c.l.b16 %v126
  %v538 = vunpack.c.l.b16 %v127
  %v539 = vunpack.c.l.b16 %v128
  %v540 = vunpack.c.l.b16 %v129
  %v541 = vunpack.c.l.b16 %v130
  %v542 = vunpack.c.l.b16 %v131
  %v543 = vunpack.c.l.b16 %v132
  %v544 = vunpack.c.l.b16 %v133
  %v545 = vunpack.c.l.b16 %v134
  %v546 = vunpack.c.l.b16 %v135
  %v547 = vunpack.c.l.b16 %v136
  %v548 = vunpack.c.l.b16 %v137
  %v549 = vunpack.c.l.b16 %v138
  %v550 = vunpack.c.l.b16 %v139
  %v551 = vunpack.c.l.b16 %v140
  %v552 = vunpack.c.l.b16 %v141
  %v553 = vunpack.c.l.b16 %v142
  %v554 = vunpack.c.l.b16 %v143
  %v555 = vunpack.c.l.b16 %v144
  %v556 = vunpack.c.l.b16 %v145
  %v557 = vunpack.c.l.b16 %v146
  %v558 = vunpack.c.l.b16 %v147
  %v559 = vunpack.c.l.b16 %v148
  %v560 = vunpack.c.l.b16 %v149
  %v561 = vunpack.c.l.b16 %v150
  %v562 = vunpack.c.l.b16 %v151
  %v563 = vunpack.c.l.b16 %v152
  %v564 = vunpack.c.l.b16 %v153
  %v565 = vunpack.c.l.b16 %v154
  %v566 = vunpack.c.l.b16 %v155
  %v567 = vunpack.c.l.b16 %v156
  %v568 = vunpack.c.l.b16 %v157
  %v569 = vunpack.c.l.b16 %v158
  %v570 = vunpack.c.l.b16 %v159
  %v571 = vunpack.c.l.b16 %v160
  %v572 = vunpack.c.l.b16 %v161
  %v573 = vunpack.c.l.b16 %v162
  %v574 = vunpack.c.l.b16 %v163
  %v575 = vunpack.c.l.b16 %v164
  %v576 = vunpack.c.l.b16 %v165
  %v577 = vunpack.c.l.b16 %v166
  %v578 = vunpack.c.l.b16 %v167
  %v579 = vunpack.c.l.b16 %v168
  %v580 = vunpack.c.l.b16 %v169
  %v581 = vunpack.c.l.b16 %v170
  %v582 = vpack.c.b16 %v455, %v454
  %v583 = vpack.c.b16 %v457, %v456
  %v584 = vpack.c.b16 %v459, %v458
  %v585 = vpack.c.b16 %v461, %v460
  %v586 = vpack.c.b16 %v463, %v462
  %v587 = vpack.c.b16 %v465, %v464
  %v588 = vpack.c.b16 %v467, %v466
  %v589 = vpack.c.b16 %v469, %v468
  %v590 = vpack.c.b16 %v471, %v470
  %v591 = vpack.c.b16 %v473, %v472
  %v592 = vpack.c.b16 %v475, %v474
  %v593 = vpack.c.b16 %v477, %v476
  %v594 = vpack.c.b16 %v479, %v478
  %v595 = vpack.c.b16 %v481, %v480
  %v596 = vpack.c.b16 %v483, %v482
  %v597 = vpack.c.b16 %v485, %v484
  %v598 = vpack.c.b16 %v487, %v486
  %v599 = vpack.c.b16 %v489, %v488
  %v600 = vpack.c.b16 %v491, %v490
  %v601 = vpack.c.b16 %v493, %v492
  %v602 = vpack.c.b16 %v495, %v494
  %v603 = vpack.c.b16 %v497, %v496
  %v604 = vpack.c.b16 %v499, %v498
  %v605 = vpack.c.b16 %v501, %v500
  %v606 = vpack.c.b16 %v503, %v502
  %v607 = vpack.c.b16 %v505, %v504
  %v608 = vpack.c.b16 %v507, %v506
  %v609 = vpack.c.b16 %v509, %v508
  %v610 = vpack.c.b16 %v511, %v510
  %v611 = vpack.c.b16 %v513, %v512
  %v612 = vpack.c.b16 %v515, %v514
  %v613 = vpack.c.b16 %v517, %v516
  %v614 = vpack.c.b16 %v519, %v518
  %v615 = vpack.c.b16 %v521, %v520
  %v616 = vpack.c.b16 %v523, %v522
  %v617 = vpack.c.b16 %v525, %v524
  %v618 = vpack.c.b16 %v527, %v526
  %v619 = vpack.c.b16 %v529, %v528
  %v620 = vpack.c.b16 %v531, %v530
  %v621 = vpack.c.b16 %v533, %v532
  %v622 = vpack.c.b16 %v535, %v534
  %v623 = vpack.c.b16 %v537, %v536
  %v624 = vpack.c.b16 %v539, %v538
  %v625 = vpack.c.b16 %v541, %v540
  %v626 = vpack.c.b16 %v543, %v542
  %v627 = vpack.c.b16 %v545, %v544
  %v628 = vpack.c.b16 %v547, %v546
  %v629 = vpack.c.b16 %v549, %v548
  %v630 = vpack.c.b16 %v551, %v550
  %v631 = vpack.c.b16 %v553, %v552
  %v632 = vpack.c.b16 %v555, %v554
  %v633 = vpack.c.b16 %v557, %v556
  %v634 = vpack.c.b16 %v559, %v558
  %v635 = vpack.c.b16 %v561, %v560
  %v636 = vpack.c.b16 %v563, %v562
  %v637 = vpack.c.b16 %v565, %v564
  %v638 = vpack.c.b16 %v567, %v566
  %v639 = vpack.c.b16 %v569, %v568
  %v640 = vpack.c.b16 %v571, %v570
  %v641 = vpack.c.b16 %v573, %v572
  %v642 = vpack.c.b16 %v575, %v574
  %v643 = vpack.c.b16 %v577, %v576
  %v644 = vpack.c.b16 %v579, %v578
  %v645 = vpack.c.b16 %v581, %v580
  %710 = vmatprep.subr.bf16.mxu0 0
  %711 = vmatpush1.bf16.msra.mxu0 %v582
  %712 = vmatprep.subr.bf16.mxu0 0
  %713 = vmatpush1.bf16.msra.mxu0 %v583
  %714 = vmatprep.subr.bf16.mxu0 0
  %715 = vmatpush1.bf16.msra.mxu0 %v584
  %716 = vmatprep.subr.bf16.mxu0 0
  %717 = vmatpush1.bf16.msra.mxu0 %v585
  %718 = vmatprep.subr.bf16.mxu0 0
  %719 = vmatpush1.bf16.msra.mxu0 %v586
  %720 = vmatprep.subr.bf16.mxu0 0
  %721 = vmatpush1.bf16.msra.mxu0 %v587
  %722 = vmatprep.subr.bf16.mxu0 0
  %723 = vmatpush1.bf16.msra.mxu0 %v588
  %724 = vmatprep.subr.bf16.mxu0 0
  %725 = vmatpush1.bf16.msra.mxu0 %v589
  %726 = vmatprep.subr.bf16.mxu0 0
  %727 = vmatpush1.bf16.msra.mxu0 %v590
  %728 = vmatprep.subr.bf16.mxu0 0
  %729 = vmatpush1.bf16.msra.mxu0 %v591
  %730 = vmatprep.subr.bf16.mxu0 0
  %731 = vmatpush1.bf16.msra.mxu0 %v592
  %732 = vmatprep.subr.bf16.mxu0 0
  %733 = vmatpush1.bf16.msra.mxu0 %v593
  %734 = vmatprep.subr.bf16.mxu0 0
  %735 = vmatpush1.bf16.msra.mxu0 %v594
  %736 = vmatprep.subr.bf16.mxu0 0
  %737 = vmatpush1.bf16.msra.mxu0 %v595
  %738 = vmatprep.subr.bf16.mxu0 0
  %739 = vmatpush1.bf16.msra.mxu0 %v596
  %740 = vmatprep.subr.bf16.mxu0 0
  %741 = vmatpush1.bf16.msra.mxu0 %v597
  %742 = vmatprep.mubr.bf16.mxu0 %v263
  %743 = vmatmul.mubr.bf16.gmra.mrb[0].mxu0 %v262
  %v744 = vpop.f32.mrb[0].mxu0
  %v745 = vadd.f32 %v176, %v744
  %v746 = vpop.f32.mrb[0].mxu0
  %v747 = vpop.f32.mrb[0].mxu0
  %v748 = vadd.f32 %v176, %v747
  %v749 = vpop.f32.mrb[0].mxu0
  %750 = vmatprep.mubr.bf16.mxu0 %v271
  %751 = vmatmul.mubr.bf16.gmra.mrb[0].mxu0 %v270
  %v752 = vpop.f32.mrb[0].mxu0
  %v753 = vadd.f32 %v176, %v752
  %v754 = vpop.f32.mrb[0].mxu0
  %v755 = vpop.f32.mrb[0].mxu0
  %v756 = vadd.f32 %v176, %v755
  %v757 = vpop.f32.mrb[0].mxu0
  %758 = vmatprep.mubr.bf16.mxu0 %v279
  %759 = vmatmul.mubr.bf16.gmra.mrb[0].mxu0 %v278
  %v760 = vpop.f32.mrb[0].mxu0
  %v761 = vadd.f32 %v176, %v760
  %v762 = vpop.f32.mrb[0].mxu0
  %v763 = vpop.f32.mrb[0].mxu0
  %v764 = vadd.f32 %v176, %v763
  %v765 = vpop.f32.mrb[0].mxu0
  %766 = vmatprep.mubr.bf16.mxu0 %v287
  %767 = vmatmul.mubr.bf16.gmra.mrb[0].mxu0 %v286
  %v768 = vpop.f32.mrb[0].mxu0
  %v769 = vadd.f32 %v176, %v768
  %v770 = vpop.f32.mrb[0].mxu0
  %v771 = vpop.f32.mrb[0].mxu0
  %v772 = vpop.f32.mrb[0].mxu0
  %773 = vdwg.mxu0
  %774 = vmatprep.subr.bf16.mxu0 0
  %775 = vmatpush1.bf16.msra.mxu0 %v598
  %776 = vmatprep.subr.bf16.mxu0 0
  %777 = vmatpush1.bf16.msra.mxu0 %v599
  %778 = vmatprep.subr.bf16.mxu0 0
  %779 = vmatpush1.bf16.msra.mxu0 %v600
  %780 = vmatprep.subr.bf16.mxu0 0
  %781 = vmatpush1.bf16.msra.mxu0 %v601
  %782 = vmatprep.subr.bf16.mxu0 0
  %783 = vmatpush1.bf16.msra.mxu0 %v602
  %784 = vmatprep.subr.bf16.mxu0 0
  %785 = vmatpush1.bf16.msra.mxu0 %v603
  %786 = vmatprep.subr.bf16.mxu0 0
  %787 = vmatpush1.bf16.msra.mxu0 %v604
  %788 = vmatprep.subr.bf16.mxu0 0
  %789 = vmatpush1.bf16.msra.mxu0 %v605
  %790 = vmatprep.subr.bf16.mxu0 0
  %791 = vmatpush1.bf16.msra.mxu0 %v606
  %792 = vmatprep.subr.bf16.mxu0 0
  %793 = vmatpush1.bf16.msra.mxu0 %v607
  %794 = vmatprep.subr.bf16.mxu0 0
  %795 = vmatpush1.bf16.msra.mxu0 %v608
  %796 = vmatprep.subr.bf16.mxu0 0
  %797 = vmatpush1.bf16.msra.mxu0 %v609
  %798 = vmatprep.subr.bf16.mxu0 0
  %799 = vmatpush1.bf16.msra.mxu0 %v610
  %800 = vmatprep.subr.bf16.mxu0 0
  %801 = vmatpush1.bf16.msra.mxu0 %v611
  %802 = vmatprep.subr.bf16.mxu0 0
  %803 = vmatpush1.bf16.msra.mxu0 %v612
  %804 = vmatprep.subr.bf16.mxu0 0
  %805 = vmatpush1.bf16.msra.mxu0 %v613
  %806 = vmatprep.mubr.bf16.mxu0 %v265
  %807 = vmatmul.mubr.bf16.gmra.mrb[0].mxu0 %v264
  %v808 = vpop.f32.mrb[0].mxu0
  %v809 = vadd.f32 %v745, %v808
  %v810 = vpop.f32.mrb[0].mxu0
  %v811 = vpop.f32.mrb[0].mxu0
  %v812 = vadd.f32 %v748, %v811
  %v813 = vpop.f32.mrb[0].mxu0
  %814 = vmatprep.mubr.bf16.mxu0 %v273
  %815 = vmatmul.mubr.bf16.gmra.mrb[0].mxu0 %v272
  %v816 = vpop.f32.mrb[0].mxu0
  %v817 = vadd.f32 %v753, %v816
  %v818 = vpop.f32.mrb[0].mxu0
  %v819 = vpop.f32.mrb[0].mxu0
  %v820 = vadd.f32 %v756, %v819
  %v821 = vpop.f32.mrb[0].mxu0
  %822 = vmatprep.mubr.bf16.mxu0 %v281
  %823 = vmatmul.mubr.bf16.gmra.mrb[0].mxu0 %v280
  %v824 = vpop.f32.mrb[0].mxu0
  %v825 = vadd.f32 %v761, %v824
  %v826 = vpop.f32.mrb[0].mxu0
  %v827 = vpop.f32.mrb[0].mxu0
  %v828 = vadd.f32 %v764, %v827
  %v829 = vpop.f32.mrb[0].mxu0
  %830 = vmatprep.mubr.bf16.mxu0 %v289
  %831 = vmatmul.mubr.bf16.gmra.mrb[0].mxu0 %v288
  %v832 = vpop.f32.mrb[0].mxu0
  %v833 = vadd.f32 %v769, %v832
  %v834 = vpop.f32.mrb[0].mxu0
  %v835 = vpop.f32.mrb[0].mxu0
  %v836 = vpop.f32.mrb[0].mxu0
  %837 = vdwg.mxu0
  %838 = vmatprep.subr.bf16.mxu0 0
  %839 = vmatpush1.bf16.msra.mxu0 %v614
  %840 = vmatprep.subr.bf16.mxu0 0
  %841 = vmatpush1.bf16.msra.mxu0 %v615
  %842 = vmatprep.subr.bf16.mxu0 0
  %843 = vmatpush1.bf16.msra.mxu0 %v616
  %844 = vmatprep.subr.bf16.mxu0 0
  %845 = vmatpush1.bf16.msra.mxu0 %v617
  %846 = vmatprep.subr.bf16.mxu0 0
  %847 = vmatpush1.bf16.msra.mxu0 %v618
  %848 = vmatprep.subr.bf16.mxu0 0
  %849 = vmatpush1.bf16.msra.mxu0 %v619
  %850 = vmatprep.subr.bf16.mxu0 0
  %851 = vmatpush1.bf16.msra.mxu0 %v620
  %852 = vmatprep.subr.bf16.mxu0 0
  %853 = vmatpush1.bf16.msra.mxu0 %v621
  %854 = vmatprep.subr.bf16.mxu0 0
  %855 = vmatpush1.bf16.msra.mxu0 %v622
  %856 = vmatprep.subr.bf16.mxu0 0
  %857 = vmatpush1.bf16.msra.mxu0 %v623
  %858 = vmatprep.subr.bf16.mxu0 0
  %859 = vmatpush1.bf16.msra.mxu0 %v624
  %860 = vmatprep.subr.bf16.mxu0 0
  %861 = vmatpush1.bf16.msra.mxu0 %v625
  %862 = vmatprep.subr.bf16.mxu0 0
  %863 = vmatpush1.bf16.msra.mxu0 %v626
  %864 = vmatprep.subr.bf16.mxu0 0
  %865 = vmatpush1.bf16.msra.mxu0 %v627
  %866 = vmatprep.subr.bf16.mxu0 0
  %867 = vmatpush1.bf16.msra.mxu0 %v628
  %868 = vmatprep.subr.bf16.mxu0 0
  %869 = vmatpush1.bf16.msra.mxu0 %v629
  %870 = vmatprep.mubr.bf16.mxu0 %v267
  %871 = vmatmul.mubr.bf16.gmra.mrb[0].mxu0 %v266
  %v872 = vpop.f32.mrb[0].mxu0
  %v873 = vadd.f32 %v809, %v872
  %v874 = vpop.f32.mrb[0].mxu0
  %v875 = vpop.f32.mrb[0].mxu0
  %v876 = vadd.f32 %v812, %v875
  %v877 = vpop.f32.mrb[0].mxu0
  %878 = vmatprep.mubr.bf16.mxu0 %v275
  %879 = vmatmul.mubr.bf16.gmra.mrb[0].mxu0 %v274
  %v880 = vpop.f32.mrb[0].mxu0
  %v881 = vadd.f32 %v817, %v880
  %v882 = vpop.f32.mrb[0].mxu0
  %v883 = vpop.f32.mrb[0].mxu0
  %v884 = vadd.f32 %v820, %v883
  %v885 = vpop.f32.mrb[0].mxu0
  %886 = vmatprep.mubr.bf16.mxu0 %v283
  %887 = vmatmul.mubr.bf16.gmra.mrb[0].mxu0 %v282
  %v888 = vpop.f32.mrb[0].mxu0
  %v889 = vadd.f32 %v825, %v888
  %v890 = vpop.f32.mrb[0].mxu0
  %v891 = vpop.f32.mrb[0].mxu0
  %v892 = vadd.f32 %v828, %v891
  %v893 = vpop.f32.mrb[0].mxu0
  %894 = vmatprep.mubr.bf16.mxu0 %v291
  %895 = vmatmul.mubr.bf16.gmra.mrb[0].mxu0 %v290
  %v896 = vpop.f32.mrb[0].mxu0
  %v897 = vadd.f32 %v833, %v896
  %v898 = vpop.f32.mrb[0].mxu0
  %v899 = vpop.f32.mrb[0].mxu0
  %v900 = vpop.f32.mrb[0].mxu0
  %901 = vdwg.mxu0
  %902 = vmatprep.subr.bf16.mxu0 0
  %903 = vmatpush1.bf16.msra.mxu0 %v630
  %904 = vmatprep.subr.bf16.mxu0 0
  %905 = vmatpush1.bf16.msra.mxu0 %v631
  %906 = vmatprep.subr.bf16.mxu0 0
  %907 = vmatpush1.bf16.msra.mxu0 %v632
  %908 = vmatprep.subr.bf16.mxu0 0
  %909 = vmatpush1.bf16.msra.mxu0 %v633
  %910 = vmatprep.subr.bf16.mxu0 0
  %911 = vmatpush1.bf16.msra.mxu0 %v634
  %912 = vmatprep.subr.bf16.mxu0 0
  %913 = vmatpush1.bf16.msra.mxu0 %v635
  %914 = vmatprep.subr.bf16.mxu0 0
  %915 = vmatpush1.bf16.msra.mxu0 %v636
  %916 = vmatprep.subr.bf16.mxu0 0
  %917 = vmatpush1.bf16.msra.mxu0 %v637
  %918 = vmatprep.subr.bf16.mxu0 0
  %919 = vmatpush1.bf16.msra.mxu0 %v638
  %920 = vmatprep.subr.bf16.mxu0 0
  %921 = vmatpush1.bf16.msra.mxu0 %v639
  %922 = vmatprep.subr.bf16.mxu0 0
  %923 = vmatpush1.bf16.msra.mxu0 %v640
  %924 = vmatprep.subr.bf16.mxu0 0
  %925 = vmatpush1.bf16.msra.mxu0 %v641
  %926 = vmatprep.subr.bf16.mxu0 0
  %927 = vmatpush1.bf16.msra.mxu0 %v642
  %928 = vmatprep.subr.bf16.mxu0 0
  %929 = vmatpush1.bf16.msra.mxu0 %v643
  %930 = vmatprep.subr.bf16.mxu0 0
  %931 = vmatpush1.bf16.msra.mxu0 %v644
  %932 = vmatprep.subr.bf16.mxu0 0
  %933 = vmatpush1.bf16.msra.mxu0 %v645
  %934 = vmatprep.mubr.bf16.mxu0 %v269
  %935 = vmatmul.mubr.bf16.gmra.mrb[0].mxu0 %v268
  %v936 = vpop.f32.mrb[0].mxu0
  %v937 = vadd.f32 %v873, %v936
  %v938 = vpop.f32.mrb[0].mxu0
  %v939 = vpop.f32.mrb[0].mxu0
  %v940 = vadd.f32 %v876, %v939
  %v941 = vpop.f32.mrb[0].mxu0
  %942 = vmatprep.mubr.bf16.mxu0 %v277
  %943 = vmatmul.mubr.bf16.gmra.mrb[0].mxu0 %v276
  %v944 = vpop.f32.mrb[0].mxu0
  %v945 = vadd.f32 %v881, %v944
  %v946 = vpop.f32.mrb[0].mxu0
  %v947 = vpop.f32.mrb[0].mxu0
  %v948 = vadd.f32 %v884, %v947
  %v949 = vpop.f32.mrb[0].mxu0
  %950 = vmatprep.mubr.bf16.mxu0 %v285
  %951 = vmatmul.mubr.bf16.gmra.mrb[0].mxu0 %v284
  %v952 = vpop.f32.mrb[0].mxu0
  %v953 = vadd.f32 %v889, %v952
  %v954 = vpop.f32.mrb[0].mxu0
  %v955 = vpop.f32.mrb[0].mxu0
  %v956 = vadd.f32 %v892, %v955
  %v957 = vpop.f32.mrb[0].mxu0
  %958 = vmatprep.mubr.bf16.mxu0 %v293
  %959 = vmatmul.mubr.bf16.gmra.mrb[0].mxu0 %v292
  %v960 = vpop.f32.mrb[0].mxu0
  %v961 = vadd.f32 %v897, %v960
  %v962 = vpop.f32.mrb[0].mxu0
  %v963 = vpop.f32.mrb[0].mxu0
  %v964 = vpop.f32.mrb[0].mxu0
  %965 = vdwg.mxu0
  %966 = vst [vmem:[%s3] sm:$0xff] %v937
  %967 = vst [vmem:[%s3 + $0x8] sm:$0xff] %v940
  %968 = vst [vmem:[%s3 + $0x10] sm:$0xff] %v945
  %969 = vst [vmem:[%s3 + $0x18] sm:$0xff] %v948
  %970 = vst [vmem:[%s3 + $0x20] sm:$0xff] %v953
  %971 = vst [vmem:[%s3 + $0x28] sm:$0xff] %v956
  %972 = vst [vmem:[%s3 + $0x30] sm:$0x3] %v961
  // Predicated region
  $region14: #{no_norm_discriminator_forward.9} parent=0 // pred_check
    _
  $region15: #{no_norm_discriminator_forward.9} parent=0 // pred_check_branch
    %974 = sbr.rel (0) target = $region17
  $region16: #{no_norm_discriminator_forward.9} parent=0 // pred_region
    _
  $region17: #{no_norm_discriminator_forward.9} parent=0 // pred_fallthru
    _
  // Predicated region
  $region18: #{no_norm_discriminator_forward.9} parent=0 // pred_check
    _
  $region19: #{no_norm_discriminator_forward.9} parent=0 // pred_check_branch
    %976 = sbr.rel (0) target = $region21
  $region20: #{no_norm_discriminator_forward.9} parent=0 // pred_region
    _
  $region21: #{no_norm_discriminator_forward.9} parent=0 // pred_fallthru
    _

</llo_original>
